<compile_context>
chip_gen: v5e
topology: v5e:2x2
jax: 0.10.0
libtpu: 0.0.40
codegen_flags: <defaults>
</compile_context>

<pallas_src>
import functools
import math
import time

import jax
import jax.numpy as jnp
from jax.experimental import pallas as pl
from jax.experimental.pallas import tpu as pltpu

# ----------------------------------------------------------------------------
# Model configuration (the "args" of SNeRV_T)
# ----------------------------------------------------------------------------
ENC_STRDS = (2, 2)              # encoder[0] strides
ENC2_STRDS = (2, 2)             # encoder[1]/[2] strides
ENC_DIMS0 = (16, 8)             # enc_dim='16_8' -> c_out_list = [16, 8]
ENC_DIMS2 = (16, 3)             # c_out_list2 (last forced to 3)
ENC_BLKS = 1
DEC_STRDS = (1, 1, 1, 2, 2)
FC_DIM = 16
REDUCE = 1
LOWER_WIDTH = 6
NUM_BLOCKS = 1
TEMP_STRD = (2,)                # crop_list='960_1920', emb_size=20
FC_H = FC_W = 1

NGF_LIST = []
_ngf = FC_DIM
for _s in DEC_STRDS:
    _ngf = max(int(round(_ngf / REDUCE)), LOWER_WIDTH)
    NGF_LIST.append(_ngf)

ACT_DTYPE = jnp.bfloat16        # inter-layer activation dtype (bf16 I/O, f32 accum)


# ----------------------------------------------------------------------------
# Generation-aware VMEM budgets (v7x: 64 MiB / TC; v5e/v6e: 128 MiB)
# ----------------------------------------------------------------------------
def _vmem_budgets():
    try:
        cap = int(pltpu.get_tpu_info().vmem_capacity_bytes)
    except Exception:
        cap = 64 * 1024 * 1024                      # conservative default (v7x)
    if cap <= 64 * 1024 * 1024:
        return 44 * 1024 * 1024, 20 * 1024 * 1024   # vmem_limit, tile budget
    return 96 * 1024 * 1024, 40 * 1024 * 1024


VMEM_LIMIT, TILE_BUDGET = _vmem_budgets()
TM_CAP = 4096                   # max rows per matmul tile (review: 4096-8192)


def _round_up(v, m):
    return -(-v // m) * m


# ----------------------------------------------------------------------------
# Pallas kernels
# ----------------------------------------------------------------------------
def _act_fn(x, act):
    # epilogue math kept in f32 (v5e VPU/EUP have no bf16 path)
    if act == "none":
        return x
    if act == "gelu":
        # TODO(synk): PyTorch nn.GELU defaults to exact erf; tanh approx used
        # for guaranteed Mosaic lowering (tiny numeric drift).
        c = math.sqrt(2.0 / math.pi)
        return 0.5 * x * (1.0 + jnp.tanh(c * (x + 0.044715 * x * x * x)))
    if act == "leaky01":                    # LeakyReLU(0.1)
        return jnp.where(x >= 0, x, 0.1 * x)
    if act == "tanh_half":                  # OutImg(..., out_bias='tanh')
        return jnp.tanh(x) * 0.5 + 0.5
    raise ValueError(act)


def _mm_bias_act_kernel(x_ref, w_ref, b_ref, o_ref, *, act):
    acc = jnp.dot(x_ref[...].astype(jnp.bfloat16),
                  w_ref[...].astype(jnp.bfloat16),
                  preferred_element_type=jnp.float32)
    acc = acc + b_ref[...]
    o_ref[...] = _act_fn(acc, act).astype(o_ref.dtype)


def _ln_mm_bias_act_kernel(x_ref, g_ref, bt_ref, w_ref, b_ref, o_ref, *, act, eps):
    # LayerNorm over the channel (K) axis fused with the 1x1-conv matmul.
    xf = x_ref[...].astype(jnp.float32)
    mu = jnp.mean(xf, axis=-1, keepdims=True)
    xc = xf - mu
    var = jnp.mean(xc * xc, axis=-1, keepdims=True)
    xn = xc * jax.lax.rsqrt(var + eps) * g_ref[...] + bt_ref[...]
    acc = jnp.dot(xn.astype(jnp.bfloat16), w_ref[...].astype(jnp.bfloat16),
                  preferred_element_type=jnp.float32)
    acc = acc + b_ref[...]
    o_ref[...] = _act_fn(acc, act).astype(o_ref.dtype)


def _pick_tm(M, K, N, x_bytes, o_bytes, extra_k_bytes=0):
    """Row-tile: aim for >=4 grid steps at large M, cap at TM_CAP, multiple of 16,
    double-buffered x/out tiles + resident weights must fit TILE_BUDGET."""
    tm = min(TM_CAP, max(16, _round_up(-(-M // 4), 16)))

    def need(t):
        return (2 * t * (K * x_bytes + N * o_bytes)
                + K * N * 4 + N * 4 + 2 * K * 4 + extra_k_bytes)

    while tm > 16 and need(tm) > TILE_BUDGET:
        tm = max(16, _round_up(tm // 2, 16))
    return tm


def matmul_bias_act(x, w, b, act="none", out_dtype=ACT_DTYPE, ln=None):
    """(M,K)@(K,N) + bias with fused activation (and optional fused LayerNorm
    over K).  bf16 MXU inputs (cast in-kernel), f32 accumulation, output stored
    in `out_dtype`.  N is kept un-padded (masked stores < 5-40x write blowup)."""
    M, K = x.shape
    N = w.shape[1]
    TM = _pick_tm(M, K, N, x.dtype.itemsize, jnp.dtype(out_dtype).itemsize,
                  extra_k_bytes=(8 * K if ln is not None else 0))
    Mp = _round_up(M, TM)
    xp = x if Mp == M else jnp.pad(x, ((0, Mp - M), (0, 0)))

    inputs = [xp]
    in_specs = [pl.BlockSpec((TM, K), lambda i: (i, 0))]
    if ln is not None:
        g, beta = ln
        inputs += [g.reshape(1, K).astype(jnp.float32),
                   beta.reshape(1, K).astype(jnp.float32)]
        in_specs += [pl.BlockSpec((1, K), lambda i: (0, 0)),
                     pl.BlockSpec((1, K), lambda i: (0, 0))]
        kern = functools.partial(_ln_mm_bias_act_kernel, act=act, eps=1e-6)
    else:
        kern = functools.partial(_mm_bias_act_kernel, act=act)
    inputs += [w.astype(jnp.float32), b.reshape(1, N).astype(jnp.float32)]
    in_specs += [pl.BlockSpec((K, N), lambda i: (0, 0)),
                 pl.BlockSpec((1, N), lambda i: (0, 0))]

    out = pl.pallas_call(
        kern,
        out_shape=jax.ShapeDtypeStruct((Mp, N), out_dtype),
        grid_spec=pltpu.PrefetchScalarGridSpec(
            num_scalar_prefetch=0,
            grid=(Mp // TM,),
            in_specs=in_specs,
            out_specs=pl.BlockSpec((TM, N), lambda i: (i, 0)),
        ),
        compiler_params=pltpu.CompilerParams(
            dimension_semantics=("parallel",),
            vmem_limit_bytes=VMEM_LIMIT),
    )(*inputs)
    return out if Mp == M else out[:M]


# ----------------------------------------------------------------------------
# Haar DWT (LL band) / IDWT as single fused Pallas kernels
# ----------------------------------------------------------------------------
def _dwt_ll_kernel(x_ref, m_ref, ll_ref, *, half):
    # x tile = (TR, 2W): each row = [image row 2i | image row 2i+1]
    x = x_ref[...].astype(jnp.float32)
    s = x[:, :half] + x[:, half:]                       # vertical pair-sum
    # horizontal pair-sum via 0/1 pairing matrix on the MXU
    ll_ref[...] = 0.5 * jnp.dot(s, m_ref[...], preferred_element_type=jnp.float32)


def haar_dwt2d_ll(x):
    """Orthonormal Haar 2-D DWT (J=1), low-pass band only (yh is unused by the
    forward pass).  x is NCHW f32.
    # TODO(synk): pytorch_wavelets detail-band convention is approximated; the
    # IDWT below is the exact inverse of this DWT family."""
    n, c, h, w = x.shape
    h2, w2 = h // 2, w // 2
    r = n * c * h2
    xr = x.reshape(r, 2 * w)                            # contiguous row-pair view
    m = (jnp.arange(w)[:, None] // 2 == jnp.arange(w2)[None, :]).astype(jnp.float32)
    tr = min(256, _round_up(r, 8))
    rp = _round_up(r, tr)
    if rp != r:
        xr = jnp.pad(xr, ((0, rp - r), (0, 0)))
    ll = pl.pallas_call(
        functools.partial(_dwt_ll_kernel, half=w),
        out_shape=jax.ShapeDtypeStruct((rp, w2), jnp.float32),
        grid_spec=pltpu.PrefetchScalarGridSpec(
            num_scalar_prefetch=0,
            grid=(rp // tr,),
            in_specs=[pl.BlockSpec((tr, 2 * w), lambda i: (i, 0)),
                      pl.BlockSpec((w, w2), lambda i: (0, 0))],
            out_specs=pl.BlockSpec((tr, w2), lambda i: (i, 0)),
        ),
        compiler_params=pltpu.CompilerParams(
            dimension_semantics=("parallel",),
            vmem_limit_bytes=VMEM_LIMIT),
    )(xr, m)
    return ll[:r].reshape(n, c, h2, w2)


def _idwt_kernel(ll_ref, lh_ref, hl_ref, hh_ref, e_ref, o_ref, y_ref):
    ll, lh, hl, hh = ll_ref[...], lh_ref[...], hl_ref[...], hh_ref[...]
    a = (ll + lh + hl + hh) * 0.5
    b = (ll + lh - hl - hh) * 0.5
    c = (ll - lh + hl - hh) * 0.5
    d = (ll - lh - hl + hh) * 0.5
    e, o = e_ref[...], o_ref[...]
    # interleave columns in-kernel (a->even lanes, b->odd lanes) via MXU scatter
    row0 = (jnp.dot(a, e, preferred_element_type=jnp.float32)
            + jnp.dot(b, o, preferred_element_type=jnp.float32))
    row1 = (jnp.dot(c, e, preferred_element_type=jnp.float32)
            + jnp.dot(d, o, preferred_element_type=jnp.float32))
    y_ref[...] = jnp.concatenate([row0, row1], axis=1)  # [out row 2i | out row 2i+1]


def haar_idwt2d(yl, lh, hl, hh):
    """Inverse Haar 2-D DWT.  All inputs (N,C,H2,W2) f32 -> (N,C,2H2,2W2).
    Output rows are written interleaved directly from the kernel."""
    n, c, h2, w2 = yl.shape
    w = 2 * w2
    r = n * c * h2
    e = (jnp.arange(w)[None, :] == 2 * jnp.arange(w2)[:, None]).astype(jnp.float32)
    o = (jnp.arange(w)[None, :] == 2 * jnp.arange(w2)[:, None] + 1).astype(jnp.float32)
    tr = min(256, _round_up(r, 8))
    rp = _round_up(r, tr)

    def prep(t):
        t = t.reshape(r, w2).astype(jnp.float32)
        return t if rp == r else jnp.pad(t, ((0, rp - r), (0, 0)))

    band_spec = pl.BlockSpec((tr, w2), lambda i: (i, 0))
    mat_spec = pl.BlockSpec((w2, w), lambda i: (0, 0))
    y = pl.pallas_call(
        _idwt_kernel,
        out_shape=jax.ShapeDtypeStruct((rp, 2 * w), jnp.float32),
        grid_spec=pltpu.PrefetchScalarGridSpec(
            num_scalar_prefetch=0,
            grid=(rp // tr,),
            in_specs=[band_spec, band_spec, band_spec, band_spec, mat_spec, mat_spec],
            out_specs=pl.BlockSpec((tr, 2 * w), lambda i: (i, 0)),
        ),
        compiler_params=pltpu.CompilerParams(
            dimension_semantics=("parallel",),
            vmem_limit_bytes=VMEM_LIMIT),
    )(prep(yl), prep(lh), prep(hl), prep(hh), e, o)
    return y[:r].reshape(n, c, 2 * h2, 2 * w2)


# ----------------------------------------------------------------------------
# Conv helpers (NHWC end-to-end; reshape glue in JAX under jit, matmul in Pallas)
# ----------------------------------------------------------------------------
def conv2d(x, w, b, stride=1, padding=0, act="none", out_dtype=ACT_DTYPE, ln=None):
    """NHWC conv.  x (N,H,W,C), weight in PyTorch layout (O, I, kh, kw)."""
    # TODO(synk): 3x3 convs still go through im2col; a direct halo conv would
    # need an NHCW (W-on-lanes) activation layout to avoid 8-21x VMEM lane
    # padding at this model's tiny channel counts -> left as follow-up.
    n, h, wdt, c = x.shape
    o, i_ch, kh, kw = w.shape
    if padding:
        x = jnp.pad(x, ((0, 0), (padding, padding), (padding, padding), (0, 0)))
    hp, wp = x.shape[1], x.shape[2]
    ho = (hp - kh) // stride + 1
    wo = (wp - kw) // stride + 1
    if kh == 1 and kw == 1 and stride == 1:
        patches = x.reshape(n * ho * wo, c)
        wm = w.reshape(o, i_ch).T
    else:
        cols = [x[:, i:i + stride * ho:stride, j:j + stride * wo:stride, :]
                for i in range(kh) for j in range(kw)]
        patches = jnp.stack(cols, axis=3).reshape(n * ho * wo, kh * kw * c)
        wm = w.transpose(2, 3, 1, 0).reshape(kh * kw * i_ch, o)
    y = matmul_bias_act(patches, wm, b, act, out_dtype=out_dtype, ln=ln)
    return y.reshape(n, ho, wo, o)


def conv_transpose(x, w, b, s, act="none", out_dtype=ACT_DTYPE):
    """ConvTranspose2d(Ci, Co, k=s, stride=s, pad=0) on NHWC x; weight (Ci,Co,s,s)."""
    n, h, wdt, c = x.shape
    ci, co = w.shape[0], w.shape[1]
    y = matmul_bias_act(x.reshape(n * h * wdt, c), w.reshape(ci, co * s * s),
                        jnp.repeat(b, s * s), act, out_dtype=out_dtype)
    y = y.reshape(n, h, wdt, co, s, s).transpose(0, 1, 4, 2, 5, 3)
    return y.reshape(n, h * s, wdt * s, co)


def pixel_shuffle(x, s):
    # TODO(synk): could be folded into the producing conv's output index_map;
    # for now relies on jit fusing the strided copy with adjacent ops.
    if s == 1:
        return x
    n, h, w, c = x.shape
    co = c // (s * s)
    x = x.reshape(n, h, w, co, s, s).transpose(0, 1, 4, 2, 5, 3)
    return x.reshape(n, h * s, w * s, co)


def fc_unfold(x, fc_h, fc_w):
    if fc_h == 1 and fc_w == 1:
        return x
    n, h, w, c = x.shape
    x = x.reshape(n, h, w, -1, fc_h, fc_w).transpose(0, 1, 4, 2, 5, 3)
    return x.reshape(n, h * fc_h, w * fc_w, -1)


def to_nhwc(t):
    return jnp.transpose(t, (0, 2, 3, 1))


def to_nchw(t):
    return jnp.transpose(t, (0, 3, 1, 2))


# ----------------------------------------------------------------------------
# Parameter init (deterministic, synthetic; weights kept in PyTorch layouts)
# ----------------------------------------------------------------------------
class PF:
    def __init__(self, key):
        self.key = key

    def normal(self, shape, scale):
        self.key, k = jax.random.split(self.key)
        return (scale * jax.random.normal(k, shape)).astype(jnp.float32)

    def conv(self, o, i, k):
        return {"w": self.normal((o, i, k, k), 1.0 / math.sqrt(i * k * k)),
                "b": self.normal((o,), 0.01)}

    def convT(self, ci, co, s):
        return {"w": self.normal((ci, co, s, s), 1.0 / math.sqrt(ci)),
                "b": self.normal((co,), 0.01)}


def convnext_params(pf, in_ch, dims, strds, blks):
    # TODO(synk): ConvNeXt definition not in the snippet; stage = downsample
    # conv(k=strd, s=strd) + `blks` blocks of (LN -> 1x1 expand4 -> GELU -> 1x1),
    # residual; the depthwise 7x7 of the real ConvNeXt block is omitted.
    stages = []
    prev = in_ch
    for d, s in zip(dims, strds):
        blocks = []
        for _ in range(blks):
            blocks.append({"ln_g": jnp.ones((d,), jnp.float32),
                           "ln_b": jnp.zeros((d,), jnp.float32),
                           "pw1": pf.conv(4 * d, d, 1),
                           "pw2": pf.conv(d, 4 * d, 1)})
        stages.append({"down": pf.conv(d, prev, s), "blocks": blocks})
        prev = d
    return {"stages": stages}


def rb_params(pf, cin, cout, nblocks):
    # TODO(synk): RB definition not in the snippet; head conv + residual blocks.
    return {"head": pf.conv(cout, cin, 3),
            "blocks": [{"c1": pf.conv(cout, cout, 3), "c2": pf.conv(cout, cout, 3)}
                       for _ in range(nblocks)]}


def init_params(key):
    pf = PF(key)
    P = {}
    P["enc0"] = convnext_params(pf, 3, ENC_DIMS0, ENC_STRDS, ENC_BLKS)
    P["enc1"] = convnext_params(pf, 3, ENC_DIMS2, ENC2_STRDS, ENC_BLKS)
    P["enc2"] = convnext_params(pf, 3, ENC_DIMS2, ENC2_STRDS, ENC_BLKS)

    out_f = FC_DIM * FC_H * FC_W
    P["dec0"] = pf.conv(out_f, ENC_DIMS0[-1], 1)             # NeRVBlock 1x1 + gelu
    P["temp_fc"] = pf.conv(NGF_LIST[1], 3, 1)                # temp_emb NeRVBlock
    P["temp_up"] = [pf.convT(NGF_LIST[1], NGF_LIST[1], s) for s in TEMP_STRD]

    ups = []
    ngf = FC_DIM
    for i, s in enumerate(DEC_STRDS):
        new_ngf = max(int(round(ngf / REDUCE)), LOWER_WIDTH)
        d = {"x": pf.conv(new_ngf * s * s, ngf, 3)}
        if i == len(DEC_STRDS) - 1:
            d["fuse"] = pf.conv(new_ngf, 2 * ngf, 3)
        elif i >= 2:
            d["t"] = pf.conv(new_ngf * s * s, ngf, 3)
        ups.append(d)
        ngf = new_ngf
    P["up"] = ups

    last = ngf
    # Three ConvBlock HF heads, pre-fused at init (c1 concat, c2 block-diag).
    c1s = [pf.conv(last, last, 3) for _ in range(3)]
    c2s = [pf.conv(3, last, 3) for _ in range(3)]
    w2 = jnp.zeros((9, 3 * last, 3, 3), jnp.float32)
    for i in range(3):
        w2 = w2.at[3 * i:3 * i + 3, i * last:(i + 1) * last].set(c2s[i]["w"])
    P["hf"] = {"w1": jnp.concatenate([c["w"] for c in c1s], axis=0),
               "b1": jnp.concatenate([c["b"] for c in c1s], axis=0),
               "w2": w2,
               "b2": jnp.concatenate([c["b"] for c in c2s], axis=0)}

    P["upsample5"] = pf.convT(NGF_LIST[-3], NGF_LIST[-3], 2)
    P["rb5"] = rb_params(pf, NGF_LIST[-3] + NGF_LIST[-2], NGF_LIST[-2], NUM_BLOCKS)
    P["upsample6"] = pf.convT(NGF_LIST[-2], NGF_LIST[-2], 2)
    P["rb6"] = rb_params(pf, NGF_LIST[-2] + last, last, NUM_BLOCKS)
    P["head"] = pf.conv(3, last, 3)
    return P


# ----------------------------------------------------------------------------
# Block apply functions (all NHWC, bf16 activations)
# ----------------------------------------------------------------------------
def convnext_apply(p, x, strds):
    for stage, s in zip(p["stages"], strds):
        x = conv2d(x, stage["down"]["w"], stage["down"]["b"], s, 0, "none")
        for blk in stage["blocks"]:
            y = conv2d(x, blk["pw1"]["w"], blk["pw1"]["b"], 1, 0, "gelu",
                       ln=(blk["ln_g"], blk["ln_b"]))          # LN fused in-kernel
            y = conv2d(y, blk["pw2"]["w"], blk["pw2"]["b"], 1, 0, "none")
            x = x + y
    return x


def nervblock_apply(p, x):
    # NeRVBlock(conv_type='conv', ks=0) -> 1x1 conv + GELU
    return conv2d(x, p["w"], p["b"], 1, 0, "gelu")


def up2d_apply(p, x, s):
    # TODO(synk): UpsampleBlock_2d definition not provided; conv3x3+PixelShuffle+GELU
    return pixel_shuffle(conv2d(x, p["x"]["w"], p["x"]["b"], 1, 1, "gelu"), s)


def up_apply(p, x, x2, s):
    # TODO(synk): UpsampleBlock definition not provided; upsample both streams
    y = pixel_shuffle(conv2d(x, p["x"]["w"], p["x"]["b"], 1, 1, "gelu"), s)
    y2 = pixel_shuffle(conv2d(x2, p["t"]["w"], p["t"]["b"], 1, 1, "gelu"), s)
    return y, y2


def uplast_apply(p, x, x2, s):
    # TODO(synk): UpsampleBlock_last definition not provided; upsample main stream
    # and fuse the 2 temporal HF frames (channel-concat) via a 3x3 conv.
    y = pixel_shuffle(conv2d(x, p["x"]["w"], p["x"]["b"], 1, 1, "gelu"), s)
    fuse_in = jnp.concatenate([x2[0:1], x2[1:2]], axis=-1)
    f = conv2d(fuse_in, p["fuse"]["w"], p["fuse"]["b"], 1, 1, "none")
    return y + f


def rb_apply(p, x):
    y = conv2d(x, p["head"]["w"], p["head"]["b"], 1, 1, "leaky01")
    for blk in p["blocks"]:
        r = conv2d(y, blk["c1"]["w"], blk["c1"]["b"], 1, 1, "leaky01")
        r = conv2d(r, blk["c2"]["w"], blk["c2"]["b"], 1, 1, "none")
        y = y + r
    return y


def fused_hf_apply(p, x):
    """3 ConvBlock HF heads applied as 2 wide convs (weights pre-fused at init)."""
    y1 = conv2d(x, p["w1"], p["b1"], 1, 1, "leaky01")
    y2 = conv2d(y1, p["w2"], p["b2"], 1, 1, "none", out_dtype=jnp.float32)
    return y2[..., 0:3], y2[..., 3:6], y2[..., 6:9]


# ----------------------------------------------------------------------------
# SNeRV_T forward (encoder and decoder are separately jitted)
# ----------------------------------------------------------------------------
def _encode_impl(P, inp, inp_p, inp_n):
    x3 = jnp.concatenate([inp, inp_p, inp_n], axis=0)            # (3, 3, H, W)
    yl = haar_dwt2d_ll(x3)                                       # (3, 3, H/2, W/2)
    yl_min, yl_max = yl.min(), yl.max()
    rng = yl_max - yl_min
    embed = (yl - yl_min) / jnp.where(rng == 0, jnp.float32(1.0), rng)

    inv_s2 = 1.0 / math.sqrt(2.0)
    embed_lv_p = (embed[0:1] + embed[1:2]) * inv_s2              # haar DWT1D lowpass
    embed_lv_n = (embed[0:1] + embed[2:3]) * inv_s2

    embed_curr = convnext_apply(P["enc0"], to_nhwc(embed[0:1]), ENC_STRDS)
    embed_hv_p = convnext_apply(P["enc1"], to_nhwc(embed_lv_p * 0.5), ENC2_STRDS)
    embed_hv_n = convnext_apply(P["enc2"], to_nhwc(embed_lv_n * 0.5), ENC2_STRDS)
    embed_hv = jnp.concatenate([embed_hv_p, embed_hv_n], axis=-1)
    yl_norm = jnp.stack([yl_min, yl_max])
    return embed_curr, embed_hv, yl_norm


def _decode_impl(P, embed_curr, embed_hv, yl_norm):
    emb_ch = embed_hv.shape[-1] // 2
    embed_list_nhwc = []

    out = nervblock_apply(P["dec0"], embed_curr)
    out = fc_unfold(out, FC_H, FC_W)
    embed_list_nhwc.append(out)

    out2 = jnp.concatenate([embed_hv[..., :emb_ch], embed_hv[..., emb_ch:]], axis=0)
    out2 = nervblock_apply(P["temp_fc"], out2)
    for t in P["temp_up"]:
        out2 = conv_transpose(out2, t["w"], t["b"], t["w"].shape[-1])
    out2 = fc_unfold(out2, FC_H, FC_W)

    for i, s in enumerate(DEC_STRDS):
        p = P["up"][i]
        if i < 2:
            out = up2d_apply(p, out, s)
        elif i == len(DEC_STRDS) - 1:                            # i == decoder_len - 3
            out = uplast_apply(p, out, out2, s)
        else:
            out, out2 = up_apply(p, out, out2, s)
        embed_list_nhwc.append(out)

    # ---- U-Net style pyramid -------------------------------------------------
    up1 = conv_transpose(embed_list_nhwc[-3], P["upsample5"]["w"], P["upsample5"]["b"], 2)
    unet1 = rb_apply(P["rb5"], jnp.concatenate([up1, embed_list_nhwc[-2]], axis=-1))
    unet1_up = conv_transpose(unet1, P["upsample6"]["w"], P["upsample6"]["b"], 2)
    pyr_out = rb_apply(P["rb6"], jnp.concatenate([unet1_up, embed_list_nhwc[-1]], axis=-1))

    # head + OutImg (out_bias='tanh') fused into the Pallas matmul activation
    img_yl = to_nchw(conv2d(pyr_out, P["head"]["w"], P["head"]["b"], 1, 1, "tanh_half",
                            out_dtype=jnp.float32))
    yl_out = img_yl * (yl_norm[1] - yl_norm[0]) + yl_norm[0]

    lh_nhwc, hl_nhwc, hh_nhwc = fused_hf_apply(P["hf"], pyr_out)
    lh_out, hl_out, hh_out = to_nchw(lh_nhwc), to_nchw(hl_nhwc), to_nchw(hh_nhwc)
    yh_out = jnp.stack([lh_out, hl_out, hh_out], axis=2)

    img_out = haar_idwt2d(yl_out, lh_out, hl_out, hh_out)

    embed_list_out = [to_nchw(e).astype(jnp.float32) for e in embed_list_nhwc]
    return img_out, embed_list_out, img_yl, yh_out


_encode = jax.jit(_encode_impl)
_decode = jax.jit(_decode_impl)


def snerv_t_forward(P, inp, inp_p, inp_n):
    img_embed_raw = _encode(P, inp, inp_p, inp_n)
    jax.block_until_ready(img_embed_raw)
    embed_curr, embed_hv, yl_norm = img_embed_raw

    t0 = time.time()
    img_out, embed_list_dec, img_yl, yh_out = _decode(P, embed_curr, embed_hv, yl_norm)
    jax.block_until_ready(img_out)
    # TODO(synk): first call includes jit compile; steady-state decode time only
    # on subsequent calls (matches the spirit of the reference host-side timer).
    dec_time = time.time() - t0

    img_embed = [to_nchw(embed_curr).astype(jnp.float32),
                 to_nchw(embed_hv).astype(jnp.float32),
                 yl_norm]
    embed_list = [img_embed] + list(embed_list_dec)
    return img_out, embed_list, dec_time, img_yl, yh_out


# ----------------------------------------------------------------------------
if __name__ == "__main__":
    key = jax.random.PRNGKey(0)
    k1, k2, k3, kp = jax.random.split(key, 4)
    H = W = 16
    inp = jax.random.uniform(k1, (1, 3, H, W), dtype=jnp.float32)
    inp_p = jax.random.uniform(k2, (1, 3, H, W), dtype=jnp.float32)
    inp_n = jax.random.uniform(k3, (1, 3, H, W), dtype=jnp.float32)

    params = init_params(kp)
    img_out, embed_list, dec_time, img_yl, yh_out = snerv_t_forward(params, inp, inp_p, inp_n)

    jax.block_until_ready((img_out, img_yl, yh_out))

    assert img_out.shape == (1, 3, H, W)
    assert img_yl.shape == (1, 3, H // 2, W // 2)
    assert yh_out.shape == (1, 3, 3, H // 2, W // 2)
    assert bool(jnp.isfinite(img_out).all())
    print("KERNEL_OK")
</pallas_src>

<mosaic_0001>
module attributes {stable_mosaic.version = 11 : i64} {
  func.func @_dwt_ll_kernel(%arg0: i32, %arg1: memref<72x32xf32, #tpu.memory_space<vmem>>, %arg2: memref<16x8xf32, #tpu.memory_space<vmem>>, %arg3: memref<72x8xf32, #tpu.memory_space<vmem>>) attributes {dimension_semantics = [#tpu.dimension_semantics<parallel>], iteration_bounds = array<i64: 1>, scalar_prefetch = 0 : i64, scratch_operands = 0 : i64, tpu.core_type = #tpu.core_type<tc>, window_params = [{transform_indices = @transform_0, window_bounds = array<i64: 72, 32>}, {pipeline_mode = #tpu.pipeline_mode<synchronous>, transform_indices = @transform_1, window_bounds = array<i64: 16, 8>}, {transform_indices = @transform_2, window_bounds = array<i64: 72, 8>}]} {
    %c0 = arith.constant 0 : index
    %c0_0 = arith.constant 0 : index
    %0 = vector.load %arg1[%c0, %c0_0] : memref<72x32xf32, #tpu.memory_space<vmem>>, vector<72x32xf32>
    %1 = vector.extract_strided_slice %0 {offsets = [0, 0], sizes = [72, 16], strides = [1, 1]} : vector<72x32xf32> to vector<72x16xf32>
    %2 = vector.extract_strided_slice %0 {offsets = [0, 16], sizes = [72, 16], strides = [1, 1]} : vector<72x32xf32> to vector<72x16xf32>
    %3 = arith.addf %1, %2 : vector<72x16xf32>
    %c0_1 = arith.constant 0 : index
    %c0_2 = arith.constant 0 : index
    %4 = vector.load %arg2[%c0_1, %c0_2] : memref<16x8xf32, #tpu.memory_space<vmem>>, vector<16x8xf32>
    %cst = arith.constant dense<0.000000e+00> : vector<72x8xf32>
    %5 = tpu.matmul %3, %4, %cst {dimension_numbers = #tpu.dot_dimension_numbers<[1], [0], [0], [1], [0, 0, 1, 1], [], []>} : vector<72x16xf32>, vector<16x8xf32>, vector<72x8xf32> -> vector<72x8xf32>
    %cst_3 = arith.constant 5.000000e-01 : f32
    %6 = vector.broadcast %cst_3 : f32 to vector<72x8xf32>
    %7 = arith.mulf %6, %5 : vector<72x8xf32>
    %c0_4 = arith.constant 0 : index
    %c0_5 = arith.constant 0 : index
    %8 = vector.load %arg3[%c0_4, %c0_5] : memref<72x8xf32, #tpu.memory_space<vmem>>, vector<72x8xf32>
    tpu.vector_store %arg3[%c0_4, %c0_5], %7 {strides = array<i32>} : memref<72x8xf32, #tpu.memory_space<vmem>>, vector<72x8xf32>,
    return
  }
  func.func @transform_0(%arg0: i32) -> (i32, i32) {
    %c0_i32 = arith.constant 0 : i32
    %c0_i32_0 = arith.constant 0 : i32
    return %arg0, %c0_i32 : i32, i32
  }
  func.func @transform_1(%arg0: i32) -> (i32, i32) {
    %c0_i32 = arith.constant 0 : i32
    %c0_i32_0 = arith.constant 0 : i32
    %c0_i32_1 = arith.constant 0 : i32
    return %c0_i32, %c0_i32_0 : i32, i32
  }
  func.func @transform_2(%arg0: i32) -> (i32, i32) {
    %c0_i32 = arith.constant 0 : i32
    %c0_i32_0 = arith.constant 0 : i32
    return %arg0, %c0_i32 : i32, i32
  }
}

module attributes {stable_mosaic.version = 11 : i64} {
  func.func @_mm_bias_act_kernel(%arg0: i32, %arg1: memref<16x12xf32, #tpu.memory_space<vmem>>, %arg2: memref<12x16xf32, #tpu.memory_space<vmem>>, %arg3: memref<1x16xf32, #tpu.memory_space<vmem>>, %arg4: memref<16x16xbf16, #tpu.memory_space<vmem>>) attributes {dimension_semantics = [#tpu.dimension_semantics<parallel>], iteration_bounds = array<i64: 1>, scalar_prefetch = 0 : i64, scratch_operands = 0 : i64, tpu.core_type = #tpu.core_type<tc>, window_params = [{transform_indices = @transform_0, window_bounds = array<i64: 16, 12>}, {pipeline_mode = #tpu.pipeline_mode<synchronous>, transform_indices = @transform_1, window_bounds = array<i64: 12, 16>}, {pipeline_mode = #tpu.pipeline_mode<synchronous>, transform_indices = @transform_2, window_bounds = array<i64: 1, 16>}, {transform_indices = @transform_3, window_bounds = array<i64: 16, 16>}]} {
    %c0 = arith.constant 0 : index
    %c0_0 = arith.constant 0 : index
    %0 = vector.load %arg1[%c0, %c0_0] : memref<16x12xf32, #tpu.memory_space<vmem>>, vector<16x12xf32>
    %1 = arith.truncf %0 : vector<16x12xf32> to vector<16x12xbf16>
    %c0_1 = arith.constant 0 : index
    %c0_2 = arith.constant 0 : index
    %2 = vector.load %arg2[%c0_1, %c0_2] : memref<12x16xf32, #tpu.memory_space<vmem>>, vector<12x16xf32>
    %3 = arith.truncf %2 : vector<12x16xf32> to vector<12x16xbf16>
    %cst = arith.constant dense<0.000000e+00> : vector<16x16xf32>
    %4 = tpu.matmul %1, %3, %cst {dimension_numbers = #tpu.dot_dimension_numbers<[1], [0], [0], [1], [0, 0, 1, 1], [], []>} : vector<16x12xbf16>, vector<12x16xbf16>, vector<16x16xf32> -> vector<16x16xf32>
    %c0_3 = arith.constant 0 : index
    %c0_4 = arith.constant 0 : index
    %5 = vector.load %arg3[%c0_3, %c0_4] : memref<1x16xf32, #tpu.memory_space<vmem>>, vector<1x16xf32>
    %6 = vector.broadcast %5 : vector<1x16xf32> to vector<16x16xf32>
    %7 = arith.addf %4, %6 : vector<16x16xf32>
    %8 = arith.truncf %7 : vector<16x16xf32> to vector<16x16xbf16>
    %c0_5 = arith.constant 0 : index
    %c0_6 = arith.constant 0 : index
    %9 = vector.load %arg4[%c0_5, %c0_6] : memref<16x16xbf16, #tpu.memory_space<vmem>>, vector<16x16xbf16>
    tpu.vector_store %arg4[%c0_5, %c0_6], %8 {strides = array<i32>} : memref<16x16xbf16, #tpu.memory_space<vmem>>, vector<16x16xbf16>,
    return
  }
  func.func @transform_0(%arg0: i32) -> (i32, i32) {
    %c0_i32 = arith.constant 0 : i32
    %c0_i32_0 = arith.constant 0 : i32
    return %arg0, %c0_i32 : i32, i32
  }
  func.func @transform_1(%arg0: i32) -> (i32, i32) {
    %c0_i32 = arith.constant 0 : i32
    %c0_i32_0 = arith.constant 0 : i32
    %c0_i32_1 = arith.constant 0 : i32
    return %c0_i32, %c0_i32_0 : i32, i32
  }
  func.func @transform_2(%arg0: i32) -> (i32, i32) {
    %c0_i32 = arith.constant 0 : i32
    %c0_i32_0 = arith.constant 0 : i32
    %c0_i32_1 = arith.constant 0 : i32
    return %c0_i32, %c0_i32_0 : i32, i32
  }
  func.func @transform_3(%arg0: i32) -> (i32, i32) {
    %c0_i32 = arith.constant 0 : i32
    %c0_i32_0 = arith.constant 0 : i32
    return %arg0, %c0_i32 : i32, i32
  }
}

module attributes {stable_mosaic.version = 11 : i64} {
  func.func @_mm_bias_act_kernel(%arg0: i32, %arg1: memref<16x64xbf16, #tpu.memory_space<vmem>>, %arg2: memref<64x16xf32, #tpu.memory_space<vmem>>, %arg3: memref<1x16xf32, #tpu.memory_space<vmem>>, %arg4: memref<16x16xbf16, #tpu.memory_space<vmem>>) attributes {dimension_semantics = [#tpu.dimension_semantics<parallel>], iteration_bounds = array<i64: 1>, scalar_prefetch = 0 : i64, scratch_operands = 0 : i64, tpu.core_type = #tpu.core_type<tc>, window_params = [{transform_indices = @transform_0, window_bounds = array<i64: 16, 64>}, {pipeline_mode = #tpu.pipeline_mode<synchronous>, transform_indices = @transform_1, window_bounds = array<i64: 64, 16>}, {pipeline_mode = #tpu.pipeline_mode<synchronous>, transform_indices = @transform_2, window_bounds = array<i64: 1, 16>}, {transform_indices = @transform_3, window_bounds = array<i64: 16, 16>}]} {
    %c0 = arith.constant 0 : index
    %c0_0 = arith.constant 0 : index
    %0 = vector.load %arg1[%c0, %c0_0] : memref<16x64xbf16, #tpu.memory_space<vmem>>, vector<16x64xbf16>
    %c0_1 = arith.constant 0 : index
    %c0_2 = arith.constant 0 : index
    %1 = vector.load %arg2[%c0_1, %c0_2] : memref<64x16xf32, #tpu.memory_space<vmem>>, vector<64x16xf32>
    %2 = arith.truncf %1 : vector<64x16xf32> to vector<64x16xbf16>
    %cst = arith.constant dense<0.000000e+00> : vector<16x16xf32>
    %3 = tpu.matmul %0, %2, %cst {dimension_numbers = #tpu.dot_dimension_numbers<[1], [0], [0], [1], [0, 0, 1, 1], [], []>} : vector<16x64xbf16>, vector<64x16xbf16>, vector<16x16xf32> -> vector<16x16xf32>
    %c0_3 = arith.constant 0 : index
    %c0_4 = arith.constant 0 : index
    %4 = vector.load %arg3[%c0_3, %c0_4] : memref<1x16xf32, #tpu.memory_space<vmem>>, vector<1x16xf32>
    %5 = vector.broadcast %4 : vector<1x16xf32> to vector<16x16xf32>
    %6 = arith.addf %3, %5 : vector<16x16xf32>
    %7 = arith.truncf %6 : vector<16x16xf32> to vector<16x16xbf16>
    %c0_5 = arith.constant 0 : index
    %c0_6 = arith.constant 0 : index
    %8 = vector.load %arg4[%c0_5, %c0_6] : memref<16x16xbf16, #tpu.memory_space<vmem>>, vector<16x16xbf16>
    tpu.vector_store %arg4[%c0_5, %c0_6], %7 {strides = array<i32>} : memref<16x16xbf16, #tpu.memory_space<vmem>>, vector<16x16xbf16>,
    return
  }
  func.func @transform_0(%arg0: i32) -> (i32, i32) {
    %c0_i32 = arith.constant 0 : i32
    %c0_i32_0 = arith.constant 0 : i32
    return %arg0, %c0_i32 : i32, i32
  }
  func.func @transform_1(%arg0: i32) -> (i32, i32) {
    %c0_i32 = arith.constant 0 : i32
    %c0_i32_0 = arith.constant 0 : i32
    %c0_i32_1 = arith.constant 0 : i32
    return %c0_i32, %c0_i32_0 : i32, i32
  }
  func.func @transform_2(%arg0: i32) -> (i32, i32) {
    %c0_i32 = arith.constant 0 : i32
    %c0_i32_0 = arith.constant 0 : i32
    %c0_i32_1 = arith.constant 0 : i32
    return %c0_i32, %c0_i32_0 : i32, i32
  }
  func.func @transform_3(%arg0: i32) -> (i32, i32) {
    %c0_i32 = arith.constant 0 : i32
    %c0_i32_0 = arith.constant 0 : i32
    return %arg0, %c0_i32 : i32, i32
  }
}

module attributes {stable_mosaic.version = 11 : i64} {
  func.func @_ln_mm_bias_act_kernel(%arg0: i32, %arg1: memref<16x16xbf16, #tpu.memory_space<vmem>>, %arg2: memref<1x16xf32, #tpu.memory_space<vmem>>, %arg3: memref<1x16xf32, #tpu.memory_space<vmem>>, %arg4: memref<16x64xf32, #tpu.memory_space<vmem>>, %arg5: memref<1x64xf32, #tpu.memory_space<vmem>>, %arg6: memref<16x64xbf16, #tpu.memory_space<vmem>>) attributes {dimension_semantics = [#tpu.dimension_semantics<parallel>], iteration_bounds = array<i64: 1>, scalar_prefetch = 0 : i64, scratch_operands = 0 : i64, tpu.core_type = #tpu.core_type<tc>, window_params = [{transform_indices = @transform_0, window_bounds = array<i64: 16, 16>}, {pipeline_mode = #tpu.pipeline_mode<synchronous>, transform_indices = @transform_1, window_bounds = array<i64: 1, 16>}, {pipeline_mode = #tpu.pipeline_mode<synchronous>, transform_indices = @transform_2, window_bounds = array<i64: 1, 16>}, {pipeline_mode = #tpu.pipeline_mode<synchronous>, transform_indices = @transform_3, window_bounds = array<i64: 16, 64>}, {pipeline_mode = #tpu.pipeline_mode<synchronous>, transform_indices = @transform_4, window_bounds = array<i64: 1, 64>}, {transform_indices = @transform_5, window_bounds = array<i64: 16, 64>}]} {
    %c0 = arith.constant 0 : index
    %c0_0 = arith.constant 0 : index
    %0 = vector.load %arg1[%c0, %c0_0] : memref<16x16xbf16, #tpu.memory_space<vmem>>, vector<16x16xbf16>
    %1 = arith.extf %0 : vector<16x16xbf16> to vector<16x16xf32>
    %cst = arith.constant dense<0.000000e+00> : vector<16xf32>
    %2 = vector.multi_reduction <add>, %1, %cst [1] : vector<16x16xf32> to vector<16xf32>
    %3 = vector.shape_cast %2 : vector<16xf32> to vector<16x1xf32>
    %cst_1 = arith.constant 1.600000e+01 : f32
    %4 = vector.broadcast %cst_1 : f32 to vector<16x1xf32>
    %5 = arith.divf %3, %4 : vector<16x1xf32>
    %6 = vector.broadcast %5 : vector<16x1xf32> to vector<16x16xf32>
    %7 = arith.subf %1, %6 : vector<16x16xf32>
    %8 = arith.mulf %7, %7 : vector<16x16xf32>
    %cst_2 = arith.constant dense<0.000000e+00> : vector<16xf32>
    %9 = vector.multi_reduction <add>, %8, %cst_2 [1] : vector<16x16xf32> to vector<16xf32>
    %10 = vector.shape_cast %9 : vector<16xf32> to vector<16x1xf32>
    %cst_3 = arith.constant 1.600000e+01 : f32
    %11 = vector.broadcast %cst_3 : f32 to vector<16x1xf32>
    %12 = arith.divf %10, %11 : vector<16x1xf32>
    %cst_4 = arith.constant 9.99999997E-7 : f32
    %13 = vector.broadcast %cst_4 : f32 to vector<16x1xf32>
    %14 = arith.addf %12, %13 : vector<16x1xf32>
    %15 = math.rsqrt %14 : vector<16x1xf32>
    %16 = vector.broadcast %15 : vector<16x1xf32> to vector<16x16xf32>
    %17 = arith.mulf %7, %16 : vector<16x16xf32>
    %c0_5 = arith.constant 0 : index
    %c0_6 = arith.constant 0 : index
    %18 = vector.load %arg2[%c0_5, %c0_6] : memref<1x16xf32, #tpu.memory_space<vmem>>, vector<1x16xf32>
    %19 = vector.broadcast %18 : vector<1x16xf32> to vector<16x16xf32>
    %20 = arith.mulf %17, %19 : vector<16x16xf32>
    %c0_7 = arith.constant 0 : index
    %c0_8 = arith.constant 0 : index
    %21 = vector.load %arg3[%c0_7, %c0_8] : memref<1x16xf32, #tpu.memory_space<vmem>>, vector<1x16xf32>
    %22 = vector.broadcast %21 : vector<1x16xf32> to vector<16x16xf32>
    %23 = arith.addf %20, %22 : vector<16x16xf32>
    %24 = arith.truncf %23 : vector<16x16xf32> to vector<16x16xbf16>
    %c0_9 = arith.constant 0 : index
    %c0_10 = arith.constant 0 : index
    %25 = vector.load %arg4[%c0_9, %c0_10] : memref<16x64xf32, #tpu.memory_space<vmem>>, vector<16x64xf32>
    %26 = arith.truncf %25 : vector<16x64xf32> to vector<16x64xbf16>
    %cst_11 = arith.constant dense<0.000000e+00> : vector<16x64xf32>
    %27 = tpu.matmul %24, %26, %cst_11 {dimension_numbers = #tpu.dot_dimension_numbers<[1], [0], [0], [1], [0, 0, 1, 1], [], []>} : vector<16x16xbf16>, vector<16x64xbf16>, vector<16x64xf32> -> vector<16x64xf32>
    %c0_12 = arith.constant 0 : index
    %c0_13 = arith.constant 0 : index
    %28 = vector.load %arg5[%c0_12, %c0_13] : memref<1x64xf32, #tpu.memory_space<vmem>>, vector<1x64xf32>
    %29 = vector.broadcast %28 : vector<1x64xf32> to vector<16x64xf32>
    %30 = arith.addf %27, %29 : vector<16x64xf32>
    %cst_14 = arith.constant 5.000000e-01 : f32
    %31 = vector.broadcast %cst_14 : f32 to vector<16x64xf32>
    %32 = arith.mulf %31, %30 : vector<16x64xf32>
    %cst_15 = arith.constant 4.471500e-02 : f32
    %33 = vector.broadcast %cst_15 : f32 to vector<16x64xf32>
    %34 = arith.mulf %33, %30 : vector<16x64xf32>
    %35 = arith.mulf %34, %30 : vector<16x64xf32>
    %36 = arith.mulf %35, %30 : vector<16x64xf32>
    %37 = arith.addf %30, %36 : vector<16x64xf32>
    %cst_16 = arith.constant 0.797884583 : f32
    %38 = vector.broadcast %cst_16 : f32 to vector<16x64xf32>
    %39 = arith.mulf %38, %37 : vector<16x64xf32>
    %40 = math.tanh %39 : vector<16x64xf32>
    %cst_17 = arith.constant 1.000000e+00 : f32
    %41 = vector.broadcast %cst_17 : f32 to vector<16x64xf32>
    %42 = arith.addf %41, %40 : vector<16x64xf32>
    %43 = arith.mulf %32, %42 : vector<16x64xf32>
    %44 = arith.truncf %43 : vector<16x64xf32> to vector<16x64xbf16>
    %c0_18 = arith.constant 0 : index
    %c0_19 = arith.constant 0 : index
    %45 = vector.load %arg6[%c0_18, %c0_19] : memref<16x64xbf16, #tpu.memory_space<vmem>>, vector<16x64xbf16>
    tpu.vector_store %arg6[%c0_18, %c0_19], %44 {strides = array<i32>} : memref<16x64xbf16, #tpu.memory_space<vmem>>, vector<16x64xbf16>,
    return
  }
  func.func @transform_0(%arg0: i32) -> (i32, i32) {
    %c0_i32 = arith.constant 0 : i32
    %c0_i32_0 = arith.constant 0 : i32
    return %arg0, %c0_i32 : i32, i32
  }
  func.func @transform_1(%arg0: i32) -> (i32, i32) {
    %c0_i32 = arith.constant 0 : i32
    %c0_i32_0 = arith.constant 0 : i32
    %c0_i32_1 = arith.constant 0 : i32
    return %c0_i32, %c0_i32_0 : i32, i32
  }
  func.func @transform_2(%arg0: i32) -> (i32, i32) {
    %c0_i32 = arith.constant 0 : i32
    %c0_i32_0 = arith.constant 0 : i32
    %c0_i32_1 = arith.constant 0 : i32
    return %c0_i32, %c0_i32_0 : i32, i32
  }
  func.func @transform_3(%arg0: i32) -> (i32, i32) {
    %c0_i32 = arith.constant 0 : i32
    %c0_i32_0 = arith.constant 0 : i32
    %c0_i32_1 = arith.constant 0 : i32
    return %c0_i32, %c0_i32_0 : i32, i32
  }
  func.func @transform_4(%arg0: i32) -> (i32, i32) {
    %c0_i32 = arith.constant 0 : i32
    %c0_i32_0 = arith.constant 0 : i32
    %c0_i32_1 = arith.constant 0 : i32
    return %c0_i32, %c0_i32_0 : i32, i32
  }
  func.func @transform_5(%arg0: i32) -> (i32, i32) {
    %c0_i32 = arith.constant 0 : i32
    %c0_i32_0 = arith.constant 0 : i32
    return %arg0, %c0_i32 : i32, i32
  }
}

module attributes {stable_mosaic.version = 11 : i64} {
  func.func @_mm_bias_act_kernel(%arg0: i32, %arg1: memref<16x64xbf16, #tpu.memory_space<vmem>>, %arg2: memref<64x3xf32, #tpu.memory_space<vmem>>, %arg3: memref<1x3xf32, #tpu.memory_space<vmem>>, %arg4: memref<16x3xbf16, #tpu.memory_space<vmem>>) attributes {dimension_semantics = [#tpu.dimension_semantics<parallel>], iteration_bounds = array<i64: 1>, scalar_prefetch = 0 : i64, scratch_operands = 0 : i64, tpu.core_type = #tpu.core_type<tc>, window_params = [{transform_indices = @transform_0, window_bounds = array<i64: 16, 64>}, {pipeline_mode = #tpu.pipeline_mode<synchronous>, transform_indices = @transform_1, window_bounds = array<i64: 64, 3>}, {pipeline_mode = #tpu.pipeline_mode<synchronous>, transform_indices = @transform_2, window_bounds = array<i64: 1, 3>}, {transform_indices = @transform_3, window_bounds = array<i64: 16, 3>}]} {
    %c0 = arith.constant 0 : index
    %c0_0 = arith.constant 0 : index
    %0 = vector.load %arg1[%c0, %c0_0] : memref<16x64xbf16, #tpu.memory_space<vmem>>, vector<16x64xbf16>
    %c0_1 = arith.constant 0 : index
    %c0_2 = arith.constant 0 : index
    %1 = vector.load %arg2[%c0_1, %c0_2] : memref<64x3xf32, #tpu.memory_space<vmem>>, vector<64x3xf32>
    %2 = arith.truncf %1 : vector<64x3xf32> to vector<64x3xbf16>
    %cst = arith.constant dense<0.000000e+00> : vector<16x3xf32>
    %3 = tpu.matmul %0, %2, %cst {dimension_numbers = #tpu.dot_dimension_numbers<[1], [0], [0], [1], [0, 0, 1, 1], [], []>} : vector<16x64xbf16>, vector<64x3xbf16>, vector<16x3xf32> -> vector<16x3xf32>
    %c0_3 = arith.constant 0 : index
    %c0_4 = arith.constant 0 : index
    %4 = vector.load %arg3[%c0_3, %c0_4] : memref<1x3xf32, #tpu.memory_space<vmem>>, vector<1x3xf32>
    %5 = vector.broadcast %4 : vector<1x3xf32> to vector<16x3xf32>
    %6 = arith.addf %3, %5 : vector<16x3xf32>
    %7 = arith.truncf %6 : vector<16x3xf32> to vector<16x3xbf16>
    %c0_5 = arith.constant 0 : index
    %c0_6 = arith.constant 0 : index
    %8 = vector.load %arg4[%c0_5, %c0_6] : memref<16x3xbf16, #tpu.memory_space<vmem>>, vector<16x3xbf16>
    tpu.vector_store %arg4[%c0_5, %c0_6], %7 {strides = array<i32>} : memref<16x3xbf16, #tpu.memory_space<vmem>>, vector<16x3xbf16>,
    return
  }
  func.func @transform_0(%arg0: i32) -> (i32, i32) {
    %c0_i32 = arith.constant 0 : i32
    %c0_i32_0 = arith.constant 0 : i32
    return %arg0, %c0_i32 : i32, i32
  }
  func.func @transform_1(%arg0: i32) -> (i32, i32) {
    %c0_i32 = arith.constant 0 : i32
    %c0_i32_0 = arith.constant 0 : i32
    %c0_i32_1 = arith.constant 0 : i32
    return %c0_i32, %c0_i32_0 : i32, i32
  }
  func.func @transform_2(%arg0: i32) -> (i32, i32) {
    %c0_i32 = arith.constant 0 : i32
    %c0_i32_0 = arith.constant 0 : i32
    %c0_i32_1 = arith.constant 0 : i32
    return %c0_i32, %c0_i32_0 : i32, i32
  }
  func.func @transform_3(%arg0: i32) -> (i32, i32) {
    %c0_i32 = arith.constant 0 : i32
    %c0_i32_0 = arith.constant 0 : i32
    return %arg0, %c0_i32 : i32, i32
  }
}

module attributes {stable_mosaic.version = 11 : i64} {
  func.func @_mm_bias_act_kernel(%arg0: i32, %arg1: memref<16x12xbf16, #tpu.memory_space<vmem>>, %arg2: memref<12x3xf32, #tpu.memory_space<vmem>>, %arg3: memref<1x3xf32, #tpu.memory_space<vmem>>, %arg4: memref<16x3xbf16, #tpu.memory_space<vmem>>) attributes {dimension_semantics = [#tpu.dimension_semantics<parallel>], iteration_bounds = array<i64: 1>, scalar_prefetch = 0 : i64, scratch_operands = 0 : i64, tpu.core_type = #tpu.core_type<tc>, window_params = [{transform_indices = @transform_0, window_bounds = array<i64: 16, 12>}, {pipeline_mode = #tpu.pipeline_mode<synchronous>, transform_indices = @transform_1, window_bounds = array<i64: 12, 3>}, {pipeline_mode = #tpu.pipeline_mode<synchronous>, transform_indices = @transform_2, window_bounds = array<i64: 1, 3>}, {transform_indices = @transform_3, window_bounds = array<i64: 16, 3>}]} {
    %c0 = arith.constant 0 : index
    %c0_0 = arith.constant 0 : index
    %0 = vector.load %arg1[%c0, %c0_0] : memref<16x12xbf16, #tpu.memory_space<vmem>>, vector<16x12xbf16>
    %c0_1 = arith.constant 0 : index
    %c0_2 = arith.constant 0 : index
    %1 = vector.load %arg2[%c0_1, %c0_2] : memref<12x3xf32, #tpu.memory_space<vmem>>, vector<12x3xf32>
    %2 = arith.truncf %1 : vector<12x3xf32> to vector<12x3xbf16>
    %cst = arith.constant dense<0.000000e+00> : vector<16x3xf32>
    %3 = tpu.matmul %0, %2, %cst {dimension_numbers = #tpu.dot_dimension_numbers<[1], [0], [0], [1], [0, 0, 1, 1], [], []>} : vector<16x12xbf16>, vector<12x3xbf16>, vector<16x3xf32> -> vector<16x3xf32>
    %c0_3 = arith.constant 0 : index
    %c0_4 = arith.constant 0 : index
    %4 = vector.load %arg3[%c0_3, %c0_4] : memref<1x3xf32, #tpu.memory_space<vmem>>, vector<1x3xf32>
    %5 = vector.broadcast %4 : vector<1x3xf32> to vector<16x3xf32>
    %6 = arith.addf %3, %5 : vector<16x3xf32>
    %7 = arith.truncf %6 : vector<16x3xf32> to vector<16x3xbf16>
    %c0_5 = arith.constant 0 : index
    %c0_6 = arith.constant 0 : index
    %8 = vector.load %arg4[%c0_5, %c0_6] : memref<16x3xbf16, #tpu.memory_space<vmem>>, vector<16x3xbf16>
    tpu.vector_store %arg4[%c0_5, %c0_6], %7 {strides = array<i32>} : memref<16x3xbf16, #tpu.memory_space<vmem>>, vector<16x3xbf16>,
    return
  }
  func.func @transform_0(%arg0: i32) -> (i32, i32) {
    %c0_i32 = arith.constant 0 : i32
    %c0_i32_0 = arith.constant 0 : i32
    return %arg0, %c0_i32 : i32, i32
  }
  func.func @transform_1(%arg0: i32) -> (i32, i32) {
    %c0_i32 = arith.constant 0 : i32
    %c0_i32_0 = arith.constant 0 : i32
    %c0_i32_1 = arith.constant 0 : i32
    return %c0_i32, %c0_i32_0 : i32, i32
  }
  func.func @transform_2(%arg0: i32) -> (i32, i32) {
    %c0_i32 = arith.constant 0 : i32
    %c0_i32_0 = arith.constant 0 : i32
    %c0_i32_1 = arith.constant 0 : i32
    return %c0_i32, %c0_i32_0 : i32, i32
  }
  func.func @transform_3(%arg0: i32) -> (i32, i32) {
    %c0_i32 = arith.constant 0 : i32
    %c0_i32_0 = arith.constant 0 : i32
    return %arg0, %c0_i32 : i32, i32
  }
}

module attributes {stable_mosaic.version = 11 : i64} {
  func.func @_ln_mm_bias_act_kernel(%arg0: i32, %arg1: memref<16x3xbf16, #tpu.memory_space<vmem>>, %arg2: memref<1x3xf32, #tpu.memory_space<vmem>>, %arg3: memref<1x3xf32, #tpu.memory_space<vmem>>, %arg4: memref<3x12xf32, #tpu.memory_space<vmem>>, %arg5: memref<1x12xf32, #tpu.memory_space<vmem>>, %arg6: memref<16x12xbf16, #tpu.memory_space<vmem>>) attributes {dimension_semantics = [#tpu.dimension_semantics<parallel>], iteration_bounds = array<i64: 1>, scalar_prefetch = 0 : i64, scratch_operands = 0 : i64, tpu.core_type = #tpu.core_type<tc>, window_params = [{transform_indices = @transform_0, window_bounds = array<i64: 16, 3>}, {pipeline_mode = #tpu.pipeline_mode<synchronous>, transform_indices = @transform_1, window_bounds = array<i64: 1, 3>}, {pipeline_mode = #tpu.pipeline_mode<synchronous>, transform_indices = @transform_2, window_bounds = array<i64: 1, 3>}, {pipeline_mode = #tpu.pipeline_mode<synchronous>, transform_indices = @transform_3, window_bounds = array<i64: 3, 12>}, {pipeline_mode = #tpu.pipeline_mode<synchronous>, transform_indices = @transform_4, window_bounds = array<i64: 1, 12>}, {transform_indices = @transform_5, window_bounds = array<i64: 16, 12>}]} {
    %c0 = arith.constant 0 : index
    %c0_0 = arith.constant 0 : index
    %0 = vector.load %arg1[%c0, %c0_0] : memref<16x3xbf16, #tpu.memory_space<vmem>>, vector<16x3xbf16>
    %1 = arith.extf %0 : vector<16x3xbf16> to vector<16x3xf32>
    %cst = arith.constant dense<0.000000e+00> : vector<16xf32>
    %2 = vector.multi_reduction <add>, %1, %cst [1] : vector<16x3xf32> to vector<16xf32>
    %3 = vector.shape_cast %2 : vector<16xf32> to vector<16x1xf32>
    %cst_1 = arith.constant 3.000000e+00 : f32
    %4 = vector.broadcast %cst_1 : f32 to vector<16x1xf32>
    %5 = arith.divf %3, %4 : vector<16x1xf32>
    %6 = vector.broadcast %5 : vector<16x1xf32> to vector<16x3xf32>
    %7 = arith.subf %1, %6 : vector<16x3xf32>
    %8 = arith.mulf %7, %7 : vector<16x3xf32>
    %cst_2 = arith.constant dense<0.000000e+00> : vector<16xf32>
    %9 = vector.multi_reduction <add>, %8, %cst_2 [1] : vector<16x3xf32> to vector<16xf32>
    %10 = vector.shape_cast %9 : vector<16xf32> to vector<16x1xf32>
    %cst_3 = arith.constant 3.000000e+00 : f32
    %11 = vector.broadcast %cst_3 : f32 to vector<16x1xf32>
    %12 = arith.divf %10, %11 : vector<16x1xf32>
    %cst_4 = arith.constant 9.99999997E-7 : f32
    %13 = vector.broadcast %cst_4 : f32 to vector<16x1xf32>
    %14 = arith.addf %12, %13 : vector<16x1xf32>
    %15 = math.rsqrt %14 : vector<16x1xf32>
    %16 = vector.broadcast %15 : vector<16x1xf32> to vector<16x3xf32>
    %17 = arith.mulf %7, %16 : vector<16x3xf32>
    %c0_5 = arith.constant 0 : index
    %c0_6 = arith.constant 0 : index
    %18 = vector.load %arg2[%c0_5, %c0_6] : memref<1x3xf32, #tpu.memory_space<vmem>>, vector<1x3xf32>
    %19 = vector.broadcast %18 : vector<1x3xf32> to vector<16x3xf32>
    %20 = arith.mulf %17, %19 : vector<16x3xf32>
    %c0_7 = arith.constant 0 : index
    %c0_8 = arith.constant 0 : index
    %21 = vector.load %arg3[%c0_7, %c0_8] : memref<1x3xf32, #tpu.memory_space<vmem>>, vector<1x3xf32>
    %22 = vector.broadcast %21 : vector<1x3xf32> to vector<16x3xf32>
    %23 = arith.addf %20, %22 : vector<16x3xf32>
    %24 = arith.truncf %23 : vector<16x3xf32> to vector<16x3xbf16>
    %c0_9 = arith.constant 0 : index
    %c0_10 = arith.constant 0 : index
    %25 = vector.load %arg4[%c0_9, %c0_10] : memref<3x12xf32, #tpu.memory_space<vmem>>, vector<3x12xf32>
    %26 = arith.truncf %25 : vector<3x12xf32> to vector<3x12xbf16>
    %cst_11 = arith.constant dense<0.000000e+00> : vector<16x12xf32>
    %27 = tpu.matmul %24, %26, %cst_11 {dimension_numbers = #tpu.dot_dimension_numbers<[1], [0], [0], [1], [0, 0, 1, 1], [], []>} : vector<16x3xbf16>, vector<3x12xbf16>, vector<16x12xf32> -> vector<16x12xf32>
    %c0_12 = arith.constant 0 : index
    %c0_13 = arith.constant 0 : index
    %28 = vector.load %arg5[%c0_12, %c0_13] : memref<1x12xf32, #tpu.memory_space<vmem>>, vector<1x12xf32>
    %29 = vector.broadcast %28 : vector<1x12xf32> to vector<16x12xf32>
    %30 = arith.addf %27, %29 : vector<16x12xf32>
    %cst_14 = arith.constant 5.000000e-01 : f32
    %31 = vector.broadcast %cst_14 : f32 to vector<16x12xf32>
    %32 = arith.mulf %31, %30 : vector<16x12xf32>
    %cst_15 = arith.constant 4.471500e-02 : f32
    %33 = vector.broadcast %cst_15 : f32 to vector<16x12xf32>
    %34 = arith.mulf %33, %30 : vector<16x12xf32>
    %35 = arith.mulf %34, %30 : vector<16x12xf32>
    %36 = arith.mulf %35, %30 : vector<16x12xf32>
    %37 = arith.addf %30, %36 : vector<16x12xf32>
    %cst_16 = arith.constant 0.797884583 : f32
    %38 = vector.broadcast %cst_16 : f32 to vector<16x12xf32>
    %39 = arith.mulf %38, %37 : vector<16x12xf32>
    %40 = math.tanh %39 : vector<16x12xf32>
    %cst_17 = arith.constant 1.000000e+00 : f32
    %41 = vector.broadcast %cst_17 : f32 to vector<16x12xf32>
    %42 = arith.addf %41, %40 : vector<16x12xf32>
    %43 = arith.mulf %32, %42 : vector<16x12xf32>
    %44 = arith.truncf %43 : vector<16x12xf32> to vector<16x12xbf16>
    %c0_18 = arith.constant 0 : index
    %c0_19 = arith.constant 0 : index
    %45 = vector.load %arg6[%c0_18, %c0_19] : memref<16x12xbf16, #tpu.memory_space<vmem>>, vector<16x12xbf16>
    tpu.vector_store %arg6[%c0_18, %c0_19], %44 {strides = array<i32>} : memref<16x12xbf16, #tpu.memory_space<vmem>>, vector<16x12xbf16>,
    return
  }
  func.func @transform_0(%arg0: i32) -> (i32, i32) {
    %c0_i32 = arith.constant 0 : i32
    %c0_i32_0 = arith.constant 0 : i32
    return %arg0, %c0_i32 : i32, i32
  }
  func.func @transform_1(%arg0: i32) -> (i32, i32) {
    %c0_i32 = arith.constant 0 : i32
    %c0_i32_0 = arith.constant 0 : i32
    %c0_i32_1 = arith.constant 0 : i32
    return %c0_i32, %c0_i32_0 : i32, i32
  }
  func.func @transform_2(%arg0: i32) -> (i32, i32) {
    %c0_i32 = arith.constant 0 : i32
    %c0_i32_0 = arith.constant 0 : i32
    %c0_i32_1 = arith.constant 0 : i32
    return %c0_i32, %c0_i32_0 : i32, i32
  }
  func.func @transform_3(%arg0: i32) -> (i32, i32) {
    %c0_i32 = arith.constant 0 : i32
    %c0_i32_0 = arith.constant 0 : i32
    %c0_i32_1 = arith.constant 0 : i32
    return %c0_i32, %c0_i32_0 : i32, i32
  }
  func.func @transform_4(%arg0: i32) -> (i32, i32) {
    %c0_i32 = arith.constant 0 : i32
    %c0_i32_0 = arith.constant 0 : i32
    %c0_i32_1 = arith.constant 0 : i32
    return %c0_i32, %c0_i32_0 : i32, i32
  }
  func.func @transform_5(%arg0: i32) -> (i32, i32) {
    %c0_i32 = arith.constant 0 : i32
    %c0_i32_0 = arith.constant 0 : i32
    return %arg0, %c0_i32 : i32, i32
  }
}

module attributes {stable_mosaic.version = 11 : i64} {
  func.func @_mm_bias_act_kernel(%arg0: i32, %arg1: memref<16x64xbf16, #tpu.memory_space<vmem>>, %arg2: memref<64x8xf32, #tpu.memory_space<vmem>>, %arg3: memref<1x8xf32, #tpu.memory_space<vmem>>, %arg4: memref<16x8xbf16, #tpu.memory_space<vmem>>) attributes {dimension_semantics = [#tpu.dimension_semantics<parallel>], iteration_bounds = array<i64: 1>, scalar_prefetch = 0 : i64, scratch_operands = 0 : i64, tpu.core_type = #tpu.core_type<tc>, window_params = [{transform_indices = @transform_0, window_bounds = array<i64: 16, 64>}, {pipeline_mode = #tpu.pipeline_mode<synchronous>, transform_indices = @transform_1, window_bounds = array<i64: 64, 8>}, {pipeline_mode = #tpu.pipeline_mode<synchronous>, transform_indices = @transform_2, window_bounds = array<i64: 1, 8>}, {transform_indices = @transform_3, window_bounds = array<i64: 16, 8>}]} {
    %c0 = arith.constant 0 : index
    %c0_0 = arith.constant 0 : index
    %0 = vector.load %arg1[%c0, %c0_0] : memref<16x64xbf16, #tpu.memory_space<vmem>>, vector<16x64xbf16>
    %c0_1 = arith.constant 0 : index
    %c0_2 = arith.constant 0 : index
    %1 = vector.load %arg2[%c0_1, %c0_2] : memref<64x8xf32, #tpu.memory_space<vmem>>, vector<64x8xf32>
    %2 = arith.truncf %1 : vector<64x8xf32> to vector<64x8xbf16>
    %cst = arith.constant dense<0.000000e+00> : vector<16x8xf32>
    %3 = tpu.matmul %0, %2, %cst {dimension_numbers = #tpu.dot_dimension_numbers<[1], [0], [0], [1], [0, 0, 1, 1], [], []>} : vector<16x64xbf16>, vector<64x8xbf16>, vector<16x8xf32> -> vector<16x8xf32>
    %c0_3 = arith.constant 0 : index
    %c0_4 = arith.constant 0 : index
    %4 = vector.load %arg3[%c0_3, %c0_4] : memref<1x8xf32, #tpu.memory_space<vmem>>, vector<1x8xf32>
    %5 = vector.broadcast %4 : vector<1x8xf32> to vector<16x8xf32>
    %6 = arith.addf %3, %5 : vector<16x8xf32>
    %7 = arith.truncf %6 : vector<16x8xf32> to vector<16x8xbf16>
    %c0_5 = arith.constant 0 : index
    %c0_6 = arith.constant 0 : index
    %8 = vector.load %arg4[%c0_5, %c0_6] : memref<16x8xbf16, #tpu.memory_space<vmem>>, vector<16x8xbf16>
    tpu.vector_store %arg4[%c0_5, %c0_6], %7 {strides = array<i32>} : memref<16x8xbf16, #tpu.memory_space<vmem>>, vector<16x8xbf16>,
    return
  }
  func.func @transform_0(%arg0: i32) -> (i32, i32) {
    %c0_i32 = arith.constant 0 : i32
    %c0_i32_0 = arith.constant 0 : i32
    return %arg0, %c0_i32 : i32, i32
  }
  func.func @transform_1(%arg0: i32) -> (i32, i32) {
    %c0_i32 = arith.constant 0 : i32
    %c0_i32_0 = arith.constant 0 : i32
    %c0_i32_1 = arith.constant 0 : i32
    return %c0_i32, %c0_i32_0 : i32, i32
  }
  func.func @transform_2(%arg0: i32) -> (i32, i32) {
    %c0_i32 = arith.constant 0 : i32
    %c0_i32_0 = arith.constant 0 : i32
    %c0_i32_1 = arith.constant 0 : i32
    return %c0_i32, %c0_i32_0 : i32, i32
  }
  func.func @transform_3(%arg0: i32) -> (i32, i32) {
    %c0_i32 = arith.constant 0 : i32
    %c0_i32_0 = arith.constant 0 : i32
    return %arg0, %c0_i32 : i32, i32
  }
}

module attributes {stable_mosaic.version = 11 : i64} {
  func.func @_ln_mm_bias_act_kernel(%arg0: i32, %arg1: memref<16x8xbf16, #tpu.memory_space<vmem>>, %arg2: memref<1x8xf32, #tpu.memory_space<vmem>>, %arg3: memref<1x8xf32, #tpu.memory_space<vmem>>, %arg4: memref<8x32xf32, #tpu.memory_space<vmem>>, %arg5: memref<1x32xf32, #tpu.memory_space<vmem>>, %arg6: memref<16x32xbf16, #tpu.memory_space<vmem>>) attributes {dimension_semantics = [#tpu.dimension_semantics<parallel>], iteration_bounds = array<i64: 1>, scalar_prefetch = 0 : i64, scratch_operands = 0 : i64, tpu.core_type = #tpu.core_type<tc>, window_params = [{transform_indices = @transform_0, window_bounds = array<i64: 16, 8>}, {pipeline_mode = #tpu.pipeline_mode<synchronous>, transform_indices = @transform_1, window_bounds = array<i64: 1, 8>}, {pipeline_mode = #tpu.pipeline_mode<synchronous>, transform_indices = @transform_2, window_bounds = array<i64: 1, 8>}, {pipeline_mode = #tpu.pipeline_mode<synchronous>, transform_indices = @transform_3, window_bounds = array<i64: 8, 32>}, {pipeline_mode = #tpu.pipeline_mode<synchronous>, transform_indices = @transform_4, window_bounds = array<i64: 1, 32>}, {transform_indices = @transform_5, window_bounds = array<i64: 16, 32>}]} {
    %c0 = arith.constant 0 : index
    %c0_0 = arith.constant 0 : index
    %0 = vector.load %arg1[%c0, %c0_0] : memref<16x8xbf16, #tpu.memory_space<vmem>>, vector<16x8xbf16>
    %1 = arith.extf %0 : vector<16x8xbf16> to vector<16x8xf32>
    %cst = arith.constant dense<0.000000e+00> : vector<16xf32>
    %2 = vector.multi_reduction <add>, %1, %cst [1] : vector<16x8xf32> to vector<16xf32>
    %3 = vector.shape_cast %2 : vector<16xf32> to vector<16x1xf32>
    %cst_1 = arith.constant 8.000000e+00 : f32
    %4 = vector.broadcast %cst_1 : f32 to vector<16x1xf32>
    %5 = arith.divf %3, %4 : vector<16x1xf32>
    %6 = vector.broadcast %5 : vector<16x1xf32> to vector<16x8xf32>
    %7 = arith.subf %1, %6 : vector<16x8xf32>
    %8 = arith.mulf %7, %7 : vector<16x8xf32>
    %cst_2 = arith.constant dense<0.000000e+00> : vector<16xf32>
    %9 = vector.multi_reduction <add>, %8, %cst_2 [1] : vector<16x8xf32> to vector<16xf32>
    %10 = vector.shape_cast %9 : vector<16xf32> to vector<16x1xf32>
    %cst_3 = arith.constant 8.000000e+00 : f32
    %11 = vector.broadcast %cst_3 : f32 to vector<16x1xf32>
    %12 = arith.divf %10, %11 : vector<16x1xf32>
    %cst_4 = arith.constant 9.99999997E-7 : f32
    %13 = vector.broadcast %cst_4 : f32 to vector<16x1xf32>
    %14 = arith.addf %12, %13 : vector<16x1xf32>
    %15 = math.rsqrt %14 : vector<16x1xf32>
    %16 = vector.broadcast %15 : vector<16x1xf32> to vector<16x8xf32>
    %17 = arith.mulf %7, %16 : vector<16x8xf32>
    %c0_5 = arith.constant 0 : index
    %c0_6 = arith.constant 0 : index
    %18 = vector.load %arg2[%c0_5, %c0_6] : memref<1x8xf32, #tpu.memory_space<vmem>>, vector<1x8xf32>
    %19 = vector.broadcast %18 : vector<1x8xf32> to vector<16x8xf32>
    %20 = arith.mulf %17, %19 : vector<16x8xf32>
    %c0_7 = arith.constant 0 : index
    %c0_8 = arith.constant 0 : index
    %21 = vector.load %arg3[%c0_7, %c0_8] : memref<1x8xf32, #tpu.memory_space<vmem>>, vector<1x8xf32>
    %22 = vector.broadcast %21 : vector<1x8xf32> to vector<16x8xf32>
    %23 = arith.addf %20, %22 : vector<16x8xf32>
    %24 = arith.truncf %23 : vector<16x8xf32> to vector<16x8xbf16>
    %c0_9 = arith.constant 0 : index
    %c0_10 = arith.constant 0 : index
    %25 = vector.load %arg4[%c0_9, %c0_10] : memref<8x32xf32, #tpu.memory_space<vmem>>, vector<8x32xf32>
    %26 = arith.truncf %25 : vector<8x32xf32> to vector<8x32xbf16>
    %cst_11 = arith.constant dense<0.000000e+00> : vector<16x32xf32>
    %27 = tpu.matmul %24, %26, %cst_11 {dimension_numbers = #tpu.dot_dimension_numbers<[1], [0], [0], [1], [0, 0, 1, 1], [], []>} : vector<16x8xbf16>, vector<8x32xbf16>, vector<16x32xf32> -> vector<16x32xf32>
    %c0_12 = arith.constant 0 : index
    %c0_13 = arith.constant 0 : index
    %28 = vector.load %arg5[%c0_12, %c0_13] : memref<1x32xf32, #tpu.memory_space<vmem>>, vector<1x32xf32>
    %29 = vector.broadcast %28 : vector<1x32xf32> to vector<16x32xf32>
    %30 = arith.addf %27, %29 : vector<16x32xf32>
    %cst_14 = arith.constant 5.000000e-01 : f32
    %31 = vector.broadcast %cst_14 : f32 to vector<16x32xf32>
    %32 = arith.mulf %31, %30 : vector<16x32xf32>
    %cst_15 = arith.constant 4.471500e-02 : f32
    %33 = vector.broadcast %cst_15 : f32 to vector<16x32xf32>
    %34 = arith.mulf %33, %30 : vector<16x32xf32>
    %35 = arith.mulf %34, %30 : vector<16x32xf32>
    %36 = arith.mulf %35, %30 : vector<16x32xf32>
    %37 = arith.addf %30, %36 : vector<16x32xf32>
    %cst_16 = arith.constant 0.797884583 : f32
    %38 = vector.broadcast %cst_16 : f32 to vector<16x32xf32>
    %39 = arith.mulf %38, %37 : vector<16x32xf32>
    %40 = math.tanh %39 : vector<16x32xf32>
    %cst_17 = arith.constant 1.000000e+00 : f32
    %41 = vector.broadcast %cst_17 : f32 to vector<16x32xf32>
    %42 = arith.addf %41, %40 : vector<16x32xf32>
    %43 = arith.mulf %32, %42 : vector<16x32xf32>
    %44 = arith.truncf %43 : vector<16x32xf32> to vector<16x32xbf16>
    %c0_18 = arith.constant 0 : index
    %c0_19 = arith.constant 0 : index
    %45 = vector.load %arg6[%c0_18, %c0_19] : memref<16x32xbf16, #tpu.memory_space<vmem>>, vector<16x32xbf16>
    tpu.vector_store %arg6[%c0_18, %c0_19], %44 {strides = array<i32>} : memref<16x32xbf16, #tpu.memory_space<vmem>>, vector<16x32xbf16>,
    return
  }
  func.func @transform_0(%arg0: i32) -> (i32, i32) {
    %c0_i32 = arith.constant 0 : i32
    %c0_i32_0 = arith.constant 0 : i32
    return %arg0, %c0_i32 : i32, i32
  }
  func.func @transform_1(%arg0: i32) -> (i32, i32) {
    %c0_i32 = arith.constant 0 : i32
    %c0_i32_0 = arith.constant 0 : i32
    %c0_i32_1 = arith.constant 0 : i32
    return %c0_i32, %c0_i32_0 : i32, i32
  }
  func.func @transform_2(%arg0: i32) -> (i32, i32) {
    %c0_i32 = arith.constant 0 : i32
    %c0_i32_0 = arith.constant 0 : i32
    %c0_i32_1 = arith.constant 0 : i32
    return %c0_i32, %c0_i32_0 : i32, i32
  }
  func.func @transform_3(%arg0: i32) -> (i32, i32) {
    %c0_i32 = arith.constant 0 : i32
    %c0_i32_0 = arith.constant 0 : i32
    %c0_i32_1 = arith.constant 0 : i32
    return %c0_i32, %c0_i32_0 : i32, i32
  }
  func.func @transform_4(%arg0: i32) -> (i32, i32) {
    %c0_i32 = arith.constant 0 : i32
    %c0_i32_0 = arith.constant 0 : i32
    %c0_i32_1 = arith.constant 0 : i32
    return %c0_i32, %c0_i32_0 : i32, i32
  }
  func.func @transform_5(%arg0: i32) -> (i32, i32) {
    %c0_i32 = arith.constant 0 : i32
    %c0_i32_0 = arith.constant 0 : i32
    return %arg0, %c0_i32 : i32, i32
  }
}

module attributes {stable_mosaic.version = 11 : i64} {
  func.func @_mm_bias_act_kernel(%arg0: i32, %arg1: memref<16x32xbf16, #tpu.memory_space<vmem>>, %arg2: memref<32x8xf32, #tpu.memory_space<vmem>>, %arg3: memref<1x8xf32, #tpu.memory_space<vmem>>, %arg4: memref<16x8xbf16, #tpu.memory_space<vmem>>) attributes {dimension_semantics = [#tpu.dimension_semantics<parallel>], iteration_bounds = array<i64: 1>, scalar_prefetch = 0 : i64, scratch_operands = 0 : i64, tpu.core_type = #tpu.core_type<tc>, window_params = [{transform_indices = @transform_0, window_bounds = array<i64: 16, 32>}, {pipeline_mode = #tpu.pipeline_mode<synchronous>, transform_indices = @transform_1, window_bounds = array<i64: 32, 8>}, {pipeline_mode = #tpu.pipeline_mode<synchronous>, transform_indices = @transform_2, window_bounds = array<i64: 1, 8>}, {transform_indices = @transform_3, window_bounds = array<i64: 16, 8>}]} {
    %c0 = arith.constant 0 : index
    %c0_0 = arith.constant 0 : index
    %0 = vector.load %arg1[%c0, %c0_0] : memref<16x32xbf16, #tpu.memory_space<vmem>>, vector<16x32xbf16>
    %c0_1 = arith.constant 0 : index
    %c0_2 = arith.constant 0 : index
    %1 = vector.load %arg2[%c0_1, %c0_2] : memref<32x8xf32, #tpu.memory_space<vmem>>, vector<32x8xf32>
    %2 = arith.truncf %1 : vector<32x8xf32> to vector<32x8xbf16>
    %cst = arith.constant dense<0.000000e+00> : vector<16x8xf32>
    %3 = tpu.matmul %0, %2, %cst {dimension_numbers = #tpu.dot_dimension_numbers<[1], [0], [0], [1], [0, 0, 1, 1], [], []>} : vector<16x32xbf16>, vector<32x8xbf16>, vector<16x8xf32> -> vector<16x8xf32>
    %c0_3 = arith.constant 0 : index
    %c0_4 = arith.constant 0 : index
    %4 = vector.load %arg3[%c0_3, %c0_4] : memref<1x8xf32, #tpu.memory_space<vmem>>, vector<1x8xf32>
    %5 = vector.broadcast %4 : vector<1x8xf32> to vector<16x8xf32>
    %6 = arith.addf %3, %5 : vector<16x8xf32>
    %7 = arith.truncf %6 : vector<16x8xf32> to vector<16x8xbf16>
    %c0_5 = arith.constant 0 : index
    %c0_6 = arith.constant 0 : index
    %8 = vector.load %arg4[%c0_5, %c0_6] : memref<16x8xbf16, #tpu.memory_space<vmem>>, vector<16x8xbf16>
    tpu.vector_store %arg4[%c0_5, %c0_6], %7 {strides = array<i32>} : memref<16x8xbf16, #tpu.memory_space<vmem>>, vector<16x8xbf16>,
    return
  }
  func.func @transform_0(%arg0: i32) -> (i32, i32) {
    %c0_i32 = arith.constant 0 : i32
    %c0_i32_0 = arith.constant 0 : i32
    return %arg0, %c0_i32 : i32, i32
  }
  func.func @transform_1(%arg0: i32) -> (i32, i32) {
    %c0_i32 = arith.constant 0 : i32
    %c0_i32_0 = arith.constant 0 : i32
    %c0_i32_1 = arith.constant 0 : i32
    return %c0_i32, %c0_i32_0 : i32, i32
  }
  func.func @transform_2(%arg0: i32) -> (i32, i32) {
    %c0_i32 = arith.constant 0 : i32
    %c0_i32_0 = arith.constant 0 : i32
    %c0_i32_1 = arith.constant 0 : i32
    return %c0_i32, %c0_i32_0 : i32, i32
  }
  func.func @transform_3(%arg0: i32) -> (i32, i32) {
    %c0_i32 = arith.constant 0 : i32
    %c0_i32_0 = arith.constant 0 : i32
    return %arg0, %c0_i32 : i32, i32
  }
}

</mosaic_0001>

<llo_original>
// kernel: _encode_impl.19
$region0: #{_encode_impl.19}
  #allocation0 [shape = 'u32[]', space=smem, size = 0x4, offset = 0x4, fixed_abs, tag = 'smem constant byte address 0x4 - core index']
  #allocation1 [shape = 'u32[72,128]{1,0:T(1,128)}', space=vmem, size = 0x9000, scoped, tag = 'internal scratch']
  %s0 = inlined_call_operand.vmem [shape: f32[72,32], index: 0, kind: input, shape index: {}]
  %s1 = inlined_call_operand.vmem [shape: f32[16,8], index: 1, kind: input, shape index: {}]
  %s2 = inlined_call_operand.vmem [shape: f32[72,8], index: 2, kind: output, shape index: {}]
  %s3 = sld [smem:[#allocation0]]
  $region18: #{_encode_impl.19} parent=0
    _
  %s5 = ssub.s32 1, %s3
  %s6 = scalar_select 0, %s5, %s3
  // Predicated region
  $region2: #{_encode_impl.19} parent=0 // pred_check
    _
  $region3: #{_encode_impl.19} parent=0 // pred_check_branch
    %8 = sbr.rel (0) target = $region5
  $region4: #{_encode_impl.19} parent=0 // pred_region
    _
  $region5: #{_encode_impl.19} parent=0 // pred_fallthru
    _
  // Predicated region
  $region6: #{_encode_impl.19} parent=0 // pred_check
    _
  $region7: #{_encode_impl.19} parent=0 // pred_check_branch
    %10 = sbr.rel (0) target = $region9
  $region8: #{_encode_impl.19} parent=0 // pred_region
    _
  $region9: #{_encode_impl.19} parent=0 // pred_fallthru
    _
  %v11 = vld [vmem:[%s0] sm:$0xff]
  %v12 = vld [vmem:[%s0 + $0x8] sm:$0xff]
  %v13 = vld [vmem:[%s0 + $0x10] sm:$0xff]
  %v14 = vld [vmem:[%s0 + $0x18] sm:$0xff]
  %v15 = vld [vmem:[%s0 + $0x20] sm:$0xff]
  %v16 = vld [vmem:[%s0 + $0x28] sm:$0xff]
  %v17 = vld [vmem:[%s0 + $0x30] sm:$0xff]
  %v18 = vld [vmem:[%s0 + $0x38] sm:$0xff]
  %v19 = vld [vmem:[%s0 + $0x40] sm:$0xff]
  %29 = vrot.lane.b32.xlu0 %v11, 112
  %v30 = vpop.permute.xlu0 %29
  %31 = vrot.lane.b32.xlu0 %v12, 112
  %v32 = vpop.permute.xlu0 %31
  %33 = vrot.lane.b32.xlu0 %v13, 112
  %v34 = vpop.permute.xlu0 %33
  %35 = vrot.lane.b32.xlu0 %v14, 112
  %v36 = vpop.permute.xlu0 %35
  %37 = vrot.lane.b32.xlu0 %v15, 112
  %v38 = vpop.permute.xlu0 %37
  %39 = vrot.lane.b32.xlu0 %v16, 112
  %v40 = vpop.permute.xlu0 %39
  %41 = vrot.lane.b32.xlu0 %v17, 112
  %v42 = vpop.permute.xlu0 %41
  %43 = vrot.lane.b32.xlu0 %v18, 112
  %v44 = vpop.permute.xlu0 %43
  %45 = vrot.lane.b32.xlu0 %v19, 112
  %v46 = vpop.permute.xlu0 %45
  %v56 = vadd.f32 %v11, %v30
  %v57 = vadd.f32 %v12, %v32
  %v58 = vadd.f32 %v13, %v34
  %v59 = vadd.f32 %v14, %v36
  %v60 = vadd.f32 %v15, %v38
  %v61 = vadd.f32 %v16, %v40
  %v62 = vadd.f32 %v17, %v42
  %v63 = vadd.f32 %v18, %v44
  %v64 = vadd.f32 %v19, %v46
  %v65 = vld [vmem:[%s1] sm:$0xff]
  %v66 = vld [vmem:[%s1 + $0x8] sm:$0xff]
  %vm67 = vcmask 130048
  %v69 = vsel %vm67, %v56, 0
  %v72 = vsel %vm67, %v57, 0
  %v75 = vsel %vm67, %v58, 0
  %v78 = vsel %vm67, %v59, 0
  %v81 = vsel %vm67, %v60, 0
  %v84 = vsel %vm67, %v61, 0
  %v87 = vsel %vm67, %v62, 0
  %v90 = vsel %vm67, %v63, 0
  %v93 = vsel %vm67, %v64, 0
  %95 = vmatpush.msra.mxu0 0.0
  %96 = vmatpush.msra.mxu0 0.0
  %97 = vmatpush.msra.mxu0 0.0
  %98 = vmatpush.msra.mxu0 0.0
  %99 = vmatpush.msra.mxu0 0.0
  %100 = vmatpush.msra.mxu0 0.0
  %101 = vmatpush.msra.mxu0 0.0
  %102 = vmatpush.msra.mxu0 0.0
  %103 = vmatpush.msra.mxu0 0.0
  %104 = vmatpush.msra.mxu0 0.0
  %105 = vmatpush.msra.mxu0 0.0
  %106 = vmatpush.msra.mxu0 0.0
  %107 = vmatpush.msra.mxu0 0.0
  %108 = vmatpush.msra.mxu0 0.0
  %109 = vmatpush.msra.mxu0 %v66
  %110 = vmatpush.msra.mxu0 %v65
  %111 = vmatmul.f32.gmra.mxu0 %v69
  %v112 = vpop.f32.mrf.mxu0
  %v113 = vadd.f32 0.0, %v112
  %114 = vmatmul.f32.gmra.mxu0 %v72
  %v115 = vpop.f32.mrf.mxu0
  %v116 = vadd.f32 0.0, %v115
  %117 = vmatmul.f32.gmra.mxu0 %v75
  %v118 = vpop.f32.mrf.mxu0
  %v119 = vadd.f32 0.0, %v118
  %120 = vmatmul.f32.gmra.mxu0 %v78
  %v121 = vpop.f32.mrf.mxu0
  %v122 = vadd.f32 0.0, %v121
  %123 = vmatmul.f32.gmra.mxu0 %v81
  %v124 = vpop.f32.mrf.mxu0
  %v125 = vadd.f32 0.0, %v124
  %126 = vmatmul.f32.gmra.mxu0 %v84
  %v127 = vpop.f32.mrf.mxu0
  %v128 = vadd.f32 0.0, %v127
  %129 = vmatmul.f32.gmra.mxu0 %v87
  %v130 = vpop.f32.mrf.mxu0
  %v131 = vadd.f32 0.0, %v130
  %132 = vmatmul.f32.gmra.mxu0 %v90
  %v133 = vpop.f32.mrf.mxu0
  %v134 = vadd.f32 0.0, %v133
  %135 = vmatmul.f32.gmra.mxu0 %v93
  %v136 = vpop.f32.mrf.mxu0
  %v137 = vadd.f32 0.0, %v136
  %138 = vdwg.mxu0
  %v139 = vmul.f32 %v113, 0.5
  %v140 = vmul.f32 %v116, 0.5
  %v141 = vmul.f32 %v119, 0.5
  %v142 = vmul.f32 %v122, 0.5
  %v143 = vmul.f32 %v125, 0.5
  %v144 = vmul.f32 %v128, 0.5
  %v145 = vmul.f32 %v131, 0.5
  %v146 = vmul.f32 %v134, 0.5
  %v147 = vmul.f32 %v137, 0.5
  %vm148 = vcmask 64512
  %149 = vst.msk [vmem:[%s2] sm:$0xff] %vm148, %v139
  %150 = vst.msk [vmem:[%s2 + $0x8] sm:$0xff] %vm148, %v140
  %151 = vst.msk [vmem:[%s2 + $0x10] sm:$0xff] %vm148, %v141
  %152 = vst.msk [vmem:[%s2 + $0x18] sm:$0xff] %vm148, %v142
  %153 = vst.msk [vmem:[%s2 + $0x20] sm:$0xff] %vm148, %v143
  %154 = vst.msk [vmem:[%s2 + $0x28] sm:$0xff] %vm148, %v144
  %155 = vst.msk [vmem:[%s2 + $0x30] sm:$0xff] %vm148, %v145
  %156 = vst.msk [vmem:[%s2 + $0x38] sm:$0xff] %vm148, %v146
  %157 = vst.msk [vmem:[%s2 + $0x40] sm:$0xff] %vm148, %v147
  // Predicated region
  $region10: #{_encode_impl.19} parent=0 // pred_check
    _
  $region11: #{_encode_impl.19} parent=0 // pred_check_branch
    %159 = sbr.rel (0) target = $region13
  $region12: #{_encode_impl.19} parent=0 // pred_region
    _
  $region13: #{_encode_impl.19} parent=0 // pred_fallthru
    _
  // Predicated region
  $region14: #{_encode_impl.19} parent=0 // pred_check
    _
  $region15: #{_encode_impl.19} parent=0 // pred_check_branch
    %161 = sbr.rel (0) target = $region17
  $region16: #{_encode_impl.19} parent=0 // pred_region
    _
  $region17: #{_encode_impl.19} parent=0 // pred_fallthru
    _

// kernel: _encode_impl.32
$region0: #{_encode_impl.32}
  #allocation0 [shape = 'u32[]', space=smem, size = 0x4, offset = 0x4, fixed_abs, tag = 'smem constant byte address 0x4 - core index']
  #allocation1 [shape = 'u32[72,128]{1,0:T(1,128)}', space=vmem, size = 0x9000, scoped, tag = 'internal scratch']
  %s0 = inlined_call_operand.vmem [shape: f32[16,12], index: 0, kind: input, shape index: {}]
  %s1 = inlined_call_operand.vmem [shape: f32[12,16], index: 1, kind: input, shape index: {}]
  %s2 = inlined_call_operand.vmem [shape: f32[1,16], index: 2, kind: input, shape index: {}]
  %s3 = inlined_call_operand.vmem [shape: bf16[16,16], index: 3, kind: output, shape index: {}]
  %s4 = sld [smem:[#allocation0]]
  $region22: #{_encode_impl.32} parent=0
    _
  %s6 = ssub.s32 1, %s4
  %s7 = scalar_select 0, %s6, %s4
  // Predicated region
  $region2: #{_encode_impl.32} parent=0 // pred_check
    _
  $region3: #{_encode_impl.32} parent=0 // pred_check_branch
    %9 = sbr.rel (0) target = $region5
  $region4: #{_encode_impl.32} parent=0 // pred_region
    _
  $region5: #{_encode_impl.32} parent=0 // pred_fallthru
    _
  // Predicated region
  $region6: #{_encode_impl.32} parent=0 // pred_check
    _
  $region7: #{_encode_impl.32} parent=0 // pred_check_branch
    %11 = sbr.rel (0) target = $region9
  $region8: #{_encode_impl.32} parent=0 // pred_region
    _
  $region9: #{_encode_impl.32} parent=0 // pred_fallthru
    _
  // Predicated region
  $region10: #{_encode_impl.32} parent=0 // pred_check
    _
  $region11: #{_encode_impl.32} parent=0 // pred_check_branch
    %13 = sbr.rel (0) target = $region13
  $region12: #{_encode_impl.32} parent=0 // pred_region
    _
  $region13: #{_encode_impl.32} parent=0 // pred_fallthru
    _
  %v15 = vld [vmem:[%s0] sm:$0xff]
  %v16 = vld [vmem:[%s0 + $0x8] sm:$0xff]
  %v17 = vpack.c.bf16 %v16, %v15
  %v18 = vld [vmem:[%s1] sm:$0xff]
  %v19 = vld [vmem:[%s1 + $0x8] sm:$0xf]
  %v20 = vpack.c.bf16 %v19, %v18
  %v21 = vld [vmem:[%s2] sm:$0x1]
  %v23 = vperm.slane %v21, 0
  %vm25 = vcmask 97280
  %v27 = vsel %vm25, %v17, 0
  %vm29 = vcmask 1045504
  %v31 = vsel %vm29, %v20, 0
  %33 = vmatpush.bf16.msra.mxu0 0
  %34 = vmatpush.bf16.msra.mxu0 0
  %35 = vmatpush.bf16.msra.mxu0 0
  %36 = vmatpush.bf16.msra.mxu0 0
  %37 = vmatpush.bf16.msra.mxu0 0
  %38 = vmatpush.bf16.msra.mxu0 0
  %39 = vmatpush.bf16.msra.mxu0 0
  %40 = vmatpush.bf16.msra.mxu0 %v31
  %41 = vmatmul.bf16.gmra.mxu0 %v27
  %v42 = vpop.f32.mrf.mxu0
  %v43 = vadd.f32 %v23, %v42
  %v44 = vpop.f32.mrf.mxu0
  %v45 = vadd.f32 %v23, %v44
  %46 = vdwg.mxu0
  %v47 = vpack.c.bf16 %v43, %v43
  %v48 = vpack.c.bf16 %v45, %v45
  %vm49 = vcmask 125952
  %50 = vst.msk [vmem:[%s3] sm:$0xf] %vm49, %v47
  %51 = vst.msk [vmem:[%s3 + $0x4] sm:$0xf] %vm49, %v48
  // Predicated region
  $region14: #{_encode_impl.32} parent=0 // pred_check
    _
  $region15: #{_encode_impl.32} parent=0 // pred_check_branch
    %53 = sbr.rel (0) target = $region17
  $region16: #{_encode_impl.32} parent=0 // pred_region
    _
  $region17: #{_encode_impl.32} parent=0 // pred_fallthru
    _
  // Predicated region
  $region18: #{_encode_impl.32} parent=0 // pred_check
    _
  $region19: #{_encode_impl.32} parent=0 // pred_check_branch
    %55 = sbr.rel (0) target = $region21
  $region20: #{_encode_impl.32} parent=0 // pred_region
    _
  $region21: #{_encode_impl.32} parent=0 // pred_fallthru
    _

// kernel: _encode_impl.34
$region0: #{_encode_impl.34}
  #allocation0 [shape = 'u32[]', space=smem, size = 0x4, offset = 0x4, fixed_abs, tag = 'smem constant byte address 0x4 - core index']
  #allocation1 [shape = 'u32[72,128]{1,0:T(1,128)}', space=vmem, size = 0x9000, scoped, tag = 'internal scratch']
  %s0 = inlined_call_operand.vmem [shape: bf16[16,64], index: 0, kind: input, shape index: {}]
  %s1 = inlined_call_operand.vmem [shape: f32[64,16], index: 1, kind: input, shape index: {}]
  %s2 = inlined_call_operand.vmem [shape: f32[1,16], index: 2, kind: input, shape index: {}]
  %s3 = inlined_call_operand.vmem [shape: bf16[16,16], index: 3, kind: output, shape index: {}]
  %s4 = sld [smem:[#allocation0]]
  $region22: #{_encode_impl.34} parent=0
    _
  %s6 = ssub.s32 1, %s4
  %s7 = scalar_select 0, %s6, %s4
  // Predicated region
  $region2: #{_encode_impl.34} parent=0 // pred_check
    _
  $region3: #{_encode_impl.34} parent=0 // pred_check_branch
    %9 = sbr.rel (0) target = $region5
  $region4: #{_encode_impl.34} parent=0 // pred_region
    _
  $region5: #{_encode_impl.34} parent=0 // pred_fallthru
    _
  // Predicated region
  $region6: #{_encode_impl.34} parent=0 // pred_check
    _
  $region7: #{_encode_impl.34} parent=0 // pred_check_branch
    %11 = sbr.rel (0) target = $region9
  $region8: #{_encode_impl.34} parent=0 // pred_region
    _
  $region9: #{_encode_impl.34} parent=0 // pred_fallthru
    _
  // Predicated region
  $region10: #{_encode_impl.34} parent=0 // pred_check
    _
  $region11: #{_encode_impl.34} parent=0 // pred_check_branch
    %13 = sbr.rel (0) target = $region13
  $region12: #{_encode_impl.34} parent=0 // pred_region
    _
  $region13: #{_encode_impl.34} parent=0 // pred_fallthru
    _
  %v15 = vld [vmem:[%s0] sm:$0xf]
  %v16 = vld [vmem:[%s0 + $0x4] sm:$0xf]
  %v17 = vld [vmem:[%s1] sm:$0xff]
  %v18 = vld [vmem:[%s1 + $0x8] sm:$0xff]
  %v19 = vld [vmem:[%s1 + $0x10] sm:$0xff]
  %v20 = vld [vmem:[%s1 + $0x18] sm:$0xff]
  %v21 = vld [vmem:[%s1 + $0x20] sm:$0xff]
  %v22 = vld [vmem:[%s1 + $0x28] sm:$0xff]
  %v23 = vld [vmem:[%s1 + $0x30] sm:$0xff]
  %v24 = vld [vmem:[%s1 + $0x38] sm:$0xff]
  %v25 = vpack.c.bf16 %v18, %v17
  %v26 = vpack.c.bf16 %v20, %v19
  %v27 = vpack.c.bf16 %v22, %v21
  %v28 = vpack.c.bf16 %v24, %v23
  %v29 = vld [vmem:[%s2] sm:$0x1]
  %v31 = vperm.slane %v29, 0
  %v35 = vunpack.c.l.b16 %v15
  %v36 = vunpack.c.l.b16 %v16
  %v37 = vpack.c.b16 %v36, %v35
  %vm38 = vcmask 523264
  %v40 = vsel %vm38, %v37, 0
  %42 = vmatpush.bf16.msra.mxu0 0
  %43 = vmatpush.bf16.msra.mxu0 0
  %44 = vmatpush.bf16.msra.mxu0 0
  %45 = vmatpush.bf16.msra.mxu0 0
  %46 = vmatpush.bf16.msra.mxu0 %v28
  %47 = vmatpush.bf16.msra.mxu0 %v27
  %48 = vmatpush.bf16.msra.mxu0 %v26
  %49 = vmatpush.bf16.msra.mxu0 %v25
  %50 = vmatmul.bf16.gmra.mxu0 %v40
  %v51 = vpop.f32.mrf.mxu0
  %v52 = vadd.f32 %v31, %v51
  %v53 = vpop.f32.mrf.mxu0
  %v54 = vadd.f32 %v31, %v53
  %55 = vdwg.mxu0
  %v56 = vpack.c.bf16 %v52, %v52
  %v57 = vpack.c.bf16 %v54, %v54
  %vm58 = vcmask 125952
  %59 = vst.msk [vmem:[%s3] sm:$0xf] %vm58, %v56
  %60 = vst.msk [vmem:[%s3 + $0x4] sm:$0xf] %vm58, %v57
  // Predicated region
  $region14: #{_encode_impl.34} parent=0 // pred_check
    _
  $region15: #{_encode_impl.34} parent=0 // pred_check_branch
    %62 = sbr.rel (0) target = $region17
  $region16: #{_encode_impl.34} parent=0 // pred_region
    _
  $region17: #{_encode_impl.34} parent=0 // pred_fallthru
    _
  // Predicated region
  $region18: #{_encode_impl.34} parent=0 // pred_check
    _
  $region19: #{_encode_impl.34} parent=0 // pred_check_branch
    %64 = sbr.rel (0) target = $region21
  $region20: #{_encode_impl.34} parent=0 // pred_region
    _
  $region21: #{_encode_impl.34} parent=0 // pred_fallthru
    _

// kernel: _encode_impl.33
$region0: #{_encode_impl.33}
  #allocation0 [shape = 'u32[]', space=smem, size = 0x4, offset = 0x4, fixed_abs, tag = 'smem constant byte address 0x4 - core index']
  #allocation1 [shape = 'u32[72,128]{1,0:T(1,128)}', space=vmem, size = 0x9000, scoped, tag = 'internal scratch']
  %s0 = inlined_call_operand.vmem [shape: bf16[16,16], index: 0, kind: input, shape index: {}]
  %s1 = inlined_call_operand.vmem [shape: f32[1,16], index: 1, kind: input, shape index: {}]
  %s2 = inlined_call_operand.vmem [shape: f32[1,16], index: 2, kind: input, shape index: {}]
  %s3 = inlined_call_operand.vmem [shape: f32[16,64], index: 3, kind: input, shape index: {}]
  %s4 = inlined_call_operand.vmem [shape: f32[1,64], index: 4, kind: input, shape index: {}]
  %s5 = inlined_call_operand.vmem [shape: bf16[16,64], index: 5, kind: output, shape index: {}]
  %s6 = sld [smem:[#allocation0]]
  $region30: #{_encode_impl.33} parent=0
    _
  %s8 = ssub.s32 1, %s6
  %s9 = scalar_select 0, %s8, %s6
  // Predicated region
  $region2: #{_encode_impl.33} parent=0 // pred_check
    _
  $region3: #{_encode_impl.33} parent=0 // pred_check_branch
    %11 = sbr.rel (0) target = $region5
  $region4: #{_encode_impl.33} parent=0 // pred_region
    _
  $region5: #{_encode_impl.33} parent=0 // pred_fallthru
    _
  // Predicated region
  $region6: #{_encode_impl.33} parent=0 // pred_check
    _
  $region7: #{_encode_impl.33} parent=0 // pred_check_branch
    %13 = sbr.rel (0) target = $region9
  $region8: #{_encode_impl.33} parent=0 // pred_region
    _
  $region9: #{_encode_impl.33} parent=0 // pred_fallthru
    _
  // Predicated region
  $region10: #{_encode_impl.33} parent=0 // pred_check
    _
  $region11: #{_encode_impl.33} parent=0 // pred_check_branch
    %15 = sbr.rel (0) target = $region13
  $region12: #{_encode_impl.33} parent=0 // pred_region
    _
  $region13: #{_encode_impl.33} parent=0 // pred_fallthru
    _
  // Predicated region
  $region14: #{_encode_impl.33} parent=0 // pred_check
    _
  $region15: #{_encode_impl.33} parent=0 // pred_check_branch
    %17 = sbr.rel (0) target = $region17
  $region16: #{_encode_impl.33} parent=0 // pred_region
    _
  $region17: #{_encode_impl.33} parent=0 // pred_fallthru
    _
  // Predicated region
  $region18: #{_encode_impl.33} parent=0 // pred_check
    _
  $region19: #{_encode_impl.33} parent=0 // pred_check_branch
    %19 = sbr.rel (0) target = $region21
  $region20: #{_encode_impl.33} parent=0 // pred_region
    _
  $region21: #{_encode_impl.33} parent=0 // pred_fallthru
    _
  %v21 = vld [vmem:[%s0] sm:$0xf]
  %v22 = vld [vmem:[%s0 + $0x4] sm:$0xf]
  %v23 = vunpack.c.l.bf16 %v21
  %v24 = vunpack.c.l.bf16 %v22
  %vm25 = vcmask 130048
  %v26 = vsel %vm25, %v23, 0.0
  %27 = vadd.xlane.f32.xlu0 %v26
  %v28 = vpop.xlane.xlu0 %27
  %v29 = vsel %vm25, %v24, 0.0
  %30 = vadd.xlane.f32.xlu0 %v29
  %v31 = vpop.xlane.xlu0 %30
  %v32 = vrcp.pop 16.0
  %v33 = vmul.f32 16.0, %v32
  %v34 = vsub.f32 1.0, %v33
  %v35 = vmul.f32 %v32, %v34
  %v36 = vadd.f32 %v32, %v35
  %vm37 = vweird.f32 %v32
  %v38 = vsel %vm37, %v32, %v36
  %v39 = vmul.f32 %v28, %v38
  %v40 = vmul.f32 %v31, %v38
  %v41 = vsub.f32 %v23, %v39
  %v42 = vsub.f32 %v24, %v40
  %v43 = vmul.f32 %v41, %v41
  %v44 = vmul.f32 %v42, %v42
  %v45 = vsel %vm25, %v43, 0.0
  %46 = vadd.xlane.f32.xlu0 %v45
  %v47 = vpop.xlane.xlu0 %46
  %v48 = vsel %vm25, %v44, 0.0
  %49 = vadd.xlane.f32.xlu0 %v48
  %v50 = vpop.xlane.xlu0 %49
  %v51 = vmul.f32 %v47, %v38
  %v52 = vmul.f32 %v50, %v38
  %v53 = vadd.f32 %v51, 1e-06
  %v54 = vadd.f32 %v52, 1e-06
  %v55 = vrsqrt.pop %v53
  %v56 = vmul.f32 %v55, %v53
  %v57 = vmul.f32 %v56, %v55
  %v58 = vmul.f32 0.5, %v57
  %v59 = vsub.f32 1.5, %v58
  %v60 = vmul.f32 %v55, %v59
  %vm61 = vweird.f32 %v53
  %vm62 = vweird.f32 %v55
  %vm63 = vmor %vm61, %vm62
  %v64 = vsel %vm63, %v55, %v60
  %v65 = vrsqrt.pop %v54
  %v66 = vmul.f32 %v65, %v54
  %v67 = vmul.f32 %v66, %v65
  %v68 = vmul.f32 0.5, %v67
  %v69 = vsub.f32 1.5, %v68
  %v70 = vmul.f32 %v65, %v69
  %vm71 = vweird.f32 %v54
  %vm72 = vweird.f32 %v65
  %vm73 = vmor %vm71, %vm72
  %v74 = vsel %vm73, %v65, %v70
  %v75 = vmul.f32 %v41, %v64
  %v76 = vmul.f32 %v42, %v74
  %v77 = vld [vmem:[%s1] sm:$0x1]
  %v79 = vperm.slane %v77, 0
  %v81 = vmul.f32 %v75, %v79
  %v82 = vmul.f32 %v76, %v79
  %v83 = vld [vmem:[%s2] sm:$0x1]
  %v85 = vperm.slane %v83, 0
  %v87 = vadd.f32 %v81, %v85
  %v88 = vadd.f32 %v82, %v85
  %v89 = vpack.c.bf16 %v88, %v87
  %v90 = vld [vmem:[%s3] sm:$0xff]
  %v91 = vld [vmem:[%s3 + $0x8] sm:$0xff]
  %v92 = vpack.c.bf16 %v91, %v90
  %v93 = vld [vmem:[%s4] sm:$0x1]
  %v95 = vperm.slane %v93, 0
  %v98 = vsel %vm25, %v89, 0
  %100 = vmatpush.bf16.msra.mxu0 0
  %101 = vmatpush.bf16.msra.mxu0 0
  %102 = vmatpush.bf16.msra.mxu0 0
  %103 = vmatpush.bf16.msra.mxu0 0
  %104 = vmatpush.bf16.msra.mxu0 0
  %105 = vmatpush.bf16.msra.mxu0 0
  %106 = vmatpush.bf16.msra.mxu0 0
  %107 = vmatpush.bf16.msra.mxu0 %v92
  %108 = vmatmul.bf16.gmra.mxu0 %v98
  %v109 = vpop.f32.mrf.mxu0
  %v110 = vadd.f32 %v95, %v109
  %v111 = vpop.f32.mrf.mxu0
  %v112 = vadd.f32 %v95, %v111
  %113 = vdwg.mxu0
  %v114 = vmul.f32 %v110, 0.5
  %v115 = vmul.f32 %v112, 0.5
  %v116 = vmul.f32 %v110, 0.044715
  %v117 = vmul.f32 %v112, 0.044715
  %v118 = vmul.f32 %v116, %v110
  %v119 = vmul.f32 %v117, %v112
  %v120 = vmul.f32 %v118, %v110
  %v121 = vmul.f32 %v119, %v112
  %v122 = vadd.f32 %v110, %v120
  %v123 = vadd.f32 %v112, %v121
  %v124 = vmul.f32 %v122, 0.7978846
  %v125 = vmul.f32 %v123, 0.7978846
  %v126 = vtanh.pop %v124
  %v127 = vtanh.pop %v125
  %v128 = vadd.f32 %v126, 1.0
  %v129 = vadd.f32 %v127, 1.0
  %v130 = vmul.f32 %v114, %v128
  %v131 = vmul.f32 %v115, %v129
  %v132 = vpack.c.bf16 %v130, %v130
  %v133 = vpack.c.bf16 %v131, %v131
  %vm134 = vcmask 519168
  %135 = vst.msk [vmem:[%s5] sm:$0xf] %vm134, %v132
  %136 = vst.msk [vmem:[%s5 + $0x4] sm:$0xf] %vm134, %v133
  // Predicated region
  $region22: #{_encode_impl.33} parent=0 // pred_check
    _
  $region23: #{_encode_impl.33} parent=0 // pred_check_branch
    %138 = sbr.rel (0) target = $region25
  $region24: #{_encode_impl.33} parent=0 // pred_region
    _
  $region25: #{_encode_impl.33} parent=0 // pred_fallthru
    _
  // Predicated region
  $region26: #{_encode_impl.33} parent=0 // pred_check
    _
  $region27: #{_encode_impl.33} parent=0 // pred_check_branch
    %140 = sbr.rel (0) target = $region29
  $region28: #{_encode_impl.33} parent=0 // pred_region
    _
  $region29: #{_encode_impl.33} parent=0 // pred_fallthru
    _

// kernel: _encode_impl.35
$region0: #{_encode_impl.35}
  #allocation0 [shape = 'u32[]', space=smem, size = 0x4, offset = 0x4, fixed_abs, tag = 'smem constant byte address 0x4 - core index']
  #allocation1 [shape = 'u32[72,128]{1,0:T(1,128)}', space=vmem, size = 0x9000, scoped, tag = 'internal scratch']
  %s0 = inlined_call_operand.vmem [shape: bf16[16,64], index: 0, kind: input, shape index: {}]
  %s1 = inlined_call_operand.vmem [shape: f32[64,3], index: 1, kind: input, shape index: {}]
  %s2 = inlined_call_operand.vmem [shape: f32[1,3], index: 2, kind: input, shape index: {}]
  %s3 = inlined_call_operand.vmem [shape: bf16[16,3], index: 3, kind: output, shape index: {}]
  %s4 = sld [smem:[#allocation0]]
  $region22: #{_encode_impl.35} parent=0
    _
  %s6 = ssub.s32 1, %s4
  %s7 = scalar_select 0, %s6, %s4
  // Predicated region
  $region2: #{_encode_impl.35} parent=0 // pred_check
    _
  $region3: #{_encode_impl.35} parent=0 // pred_check_branch
    %9 = sbr.rel (0) target = $region5
  $region4: #{_encode_impl.35} parent=0 // pred_region
    _
  $region5: #{_encode_impl.35} parent=0 // pred_fallthru
    _
  // Predicated region
  $region6: #{_encode_impl.35} parent=0 // pred_check
    _
  $region7: #{_encode_impl.35} parent=0 // pred_check_branch
    %11 = sbr.rel (0) target = $region9
  $region8: #{_encode_impl.35} parent=0 // pred_region
    _
  $region9: #{_encode_impl.35} parent=0 // pred_fallthru
    _
  // Predicated region
  $region10: #{_encode_impl.35} parent=0 // pred_check
    _
  $region11: #{_encode_impl.35} parent=0 // pred_check_branch
    %13 = sbr.rel (0) target = $region13
  $region12: #{_encode_impl.35} parent=0 // pred_region
    _
  $region13: #{_encode_impl.35} parent=0 // pred_fallthru
    _
  %v15 = vld [vmem:[%s0] sm:$0xf]
  %v16 = vld [vmem:[%s0 + $0x4] sm:$0xf]
  %v17 = vld [vmem:[%s1] sm:$0xff]
  %v18 = vld [vmem:[%s1 + $0x8] sm:$0xff]
  %v19 = vld [vmem:[%s1 + $0x10] sm:$0xff]
  %v20 = vld [vmem:[%s1 + $0x18] sm:$0xff]
  %v21 = vld [vmem:[%s1 + $0x20] sm:$0xff]
  %v22 = vld [vmem:[%s1 + $0x28] sm:$0xff]
  %v23 = vld [vmem:[%s1 + $0x30] sm:$0xff]
  %v24 = vld [vmem:[%s1 + $0x38] sm:$0xff]
  %v25 = vpack.c.bf16 %v18, %v17
  %v26 = vpack.c.bf16 %v20, %v19
  %v27 = vpack.c.bf16 %v22, %v21
  %v28 = vpack.c.bf16 %v24, %v23
  %v29 = vld [vmem:[%s2] sm:$0x1]
  %v31 = vperm.slane %v29, 0
  %v35 = vunpack.c.l.b16 %v15
  %v36 = vunpack.c.l.b16 %v16
  %v37 = vpack.c.b16 %v36, %v35
  %vm38 = vcmask 523264
  %v40 = vsel %vm38, %v37, 0
  %42 = vmatpush.bf16.msra.mxu0 0
  %43 = vmatpush.bf16.msra.mxu0 0
  %44 = vmatpush.bf16.msra.mxu0 0
  %45 = vmatpush.bf16.msra.mxu0 0
  %46 = vmatpush.bf16.msra.mxu0 %v28
  %47 = vmatpush.bf16.msra.mxu0 %v27
  %48 = vmatpush.bf16.msra.mxu0 %v26
  %49 = vmatpush.bf16.msra.mxu0 %v25
  %50 = vmatmul.bf16.gmra.mxu0 %v40
  %v51 = vpop.f32.mrf.mxu0
  %v52 = vadd.f32 %v31, %v51
  %v53 = vpop.f32.mrf.mxu0
  %v54 = vadd.f32 %v31, %v53
  %55 = vdwg.mxu0
  %v56 = vpack.c.bf16 %v52, %v52
  %v57 = vpack.c.bf16 %v54, %v54
  %vm58 = vcmask 19456
  %59 = vst.msk [vmem:[%s3] sm:$0xf] %vm58, %v56
  %60 = vst.msk [vmem:[%s3 + $0x4] sm:$0xf] %vm58, %v57
  // Predicated region
  $region14: #{_encode_impl.35} parent=0 // pred_check
    _
  $region15: #{_encode_impl.35} parent=0 // pred_check_branch
    %62 = sbr.rel (0) target = $region17
  $region16: #{_encode_impl.35} parent=0 // pred_region
    _
  $region17: #{_encode_impl.35} parent=0 // pred_fallthru
    _
  // Predicated region
  $region18: #{_encode_impl.35} parent=0 // pred_check
    _
  $region19: #{_encode_impl.35} parent=0 // pred_check_branch
    %64 = sbr.rel (0) target = $region21
  $region20: #{_encode_impl.35} parent=0 // pred_region
    _
  $region21: #{_encode_impl.35} parent=0 // pred_fallthru
    _

// kernel: _encode_impl.31
$region0: #{_encode_impl.31}
  #allocation0 [shape = 'u32[]', space=smem, size = 0x4, offset = 0x4, fixed_abs, tag = 'smem constant byte address 0x4 - core index']
  #allocation1 [shape = 'u32[72,128]{1,0:T(1,128)}', space=vmem, size = 0x9000, scoped, tag = 'internal scratch']
  %s0 = inlined_call_operand.vmem [shape: bf16[16,12], index: 0, kind: input, shape index: {}]
  %s1 = inlined_call_operand.vmem [shape: f32[12,3], index: 1, kind: input, shape index: {}]
  %s2 = inlined_call_operand.vmem [shape: f32[1,3], index: 2, kind: input, shape index: {}]
  %s3 = inlined_call_operand.vmem [shape: bf16[16,3], index: 3, kind: output, shape index: {}]
  %s4 = sld [smem:[#allocation0]]
  $region22: #{_encode_impl.31} parent=0
    _
  %s6 = ssub.s32 1, %s4
  %s7 = scalar_select 0, %s6, %s4
  // Predicated region
  $region2: #{_encode_impl.31} parent=0 // pred_check
    _
  $region3: #{_encode_impl.31} parent=0 // pred_check_branch
    %9 = sbr.rel (0) target = $region5
  $region4: #{_encode_impl.31} parent=0 // pred_region
    _
  $region5: #{_encode_impl.31} parent=0 // pred_fallthru
    _
  // Predicated region
  $region6: #{_encode_impl.31} parent=0 // pred_check
    _
  $region7: #{_encode_impl.31} parent=0 // pred_check_branch
    %11 = sbr.rel (0) target = $region9
  $region8: #{_encode_impl.31} parent=0 // pred_region
    _
  $region9: #{_encode_impl.31} parent=0 // pred_fallthru
    _
  // Predicated region
  $region10: #{_encode_impl.31} parent=0 // pred_check
    _
  $region11: #{_encode_impl.31} parent=0 // pred_check_branch
    %13 = sbr.rel (0) target = $region13
  $region12: #{_encode_impl.31} parent=0 // pred_region
    _
  $region13: #{_encode_impl.31} parent=0 // pred_fallthru
    _
  %v15 = vld [vmem:[%s0] sm:$0xf]
  %v16 = vld [vmem:[%s0 + $0x4] sm:$0xf]
  %v17 = vld [vmem:[%s1] sm:$0xff]
  %v18 = vld [vmem:[%s1 + $0x8] sm:$0xf]
  %v19 = vpack.c.bf16 %v18, %v17
  %v20 = vld [vmem:[%s2] sm:$0x1]
  %v22 = vperm.slane %v20, 0
  %v26 = vunpack.c.l.b16 %v15
  %v27 = vunpack.c.l.b16 %v16
  %v28 = vpack.c.b16 %v27, %v26
  %vm29 = vcmask 97280
  %v31 = vsel %vm29, %v28, 0
  %vm33 = vcmask 1045504
  %v35 = vsel %vm33, %v19, 0
  %37 = vmatpush.bf16.msra.mxu0 0
  %38 = vmatpush.bf16.msra.mxu0 0
  %39 = vmatpush.bf16.msra.mxu0 0
  %40 = vmatpush.bf16.msra.mxu0 0
  %41 = vmatpush.bf16.msra.mxu0 0
  %42 = vmatpush.bf16.msra.mxu0 0
  %43 = vmatpush.bf16.msra.mxu0 0
  %44 = vmatpush.bf16.msra.mxu0 %v35
  %45 = vmatmul.bf16.gmra.mxu0 %v31
  %v46 = vpop.f32.mrf.mxu0
  %v47 = vadd.f32 %v22, %v46
  %v48 = vpop.f32.mrf.mxu0
  %v49 = vadd.f32 %v22, %v48
  %50 = vdwg.mxu0
  %v51 = vpack.c.bf16 %v47, %v47
  %v52 = vpack.c.bf16 %v49, %v49
  %vm53 = vcmask 19456
  %54 = vst.msk [vmem:[%s3] sm:$0xf] %vm53, %v51
  %55 = vst.msk [vmem:[%s3 + $0x4] sm:$0xf] %vm53, %v52
  // Predicated region
  $region14: #{_encode_impl.31} parent=0 // pred_check
    _
  $region15: #{_encode_impl.31} parent=0 // pred_check_branch
    %57 = sbr.rel (0) target = $region17
  $region16: #{_encode_impl.31} parent=0 // pred_region
    _
  $region17: #{_encode_impl.31} parent=0 // pred_fallthru
    _
  // Predicated region
  $region18: #{_encode_impl.31} parent=0 // pred_check
    _
  $region19: #{_encode_impl.31} parent=0 // pred_check_branch
    %59 = sbr.rel (0) target = $region21
  $region20: #{_encode_impl.31} parent=0 // pred_region
    _
  $region21: #{_encode_impl.31} parent=0 // pred_fallthru
    _

// kernel: _encode_impl.30
$region0: #{_encode_impl.30}
  #allocation0 [shape = 'u32[]', space=smem, size = 0x4, offset = 0x4, fixed_abs, tag = 'smem constant byte address 0x4 - core index']
  #allocation1 [shape = 'u32[72,128]{1,0:T(1,128)}', space=vmem, size = 0x9000, scoped, tag = 'internal scratch']
  %s0 = inlined_call_operand.vmem [shape: bf16[16,3], index: 0, kind: input, shape index: {}]
  %s1 = inlined_call_operand.vmem [shape: f32[1,3], index: 1, kind: input, shape index: {}]
  %s2 = inlined_call_operand.vmem [shape: f32[1,3], index: 2, kind: input, shape index: {}]
  %s3 = inlined_call_operand.vmem [shape: f32[3,12], index: 3, kind: input, shape index: {}]
  %s4 = inlined_call_operand.vmem [shape: f32[1,12], index: 4, kind: input, shape index: {}]
  %s5 = inlined_call_operand.vmem [shape: bf16[16,12], index: 5, kind: output, shape index: {}]
  %s6 = sld [smem:[#allocation0]]
  $region30: #{_encode_impl.30} parent=0
    _
  %s8 = ssub.s32 1, %s6
  %s9 = scalar_select 0, %s8, %s6
  // Predicated region
  $region2: #{_encode_impl.30} parent=0 // pred_check
    _
  $region3: #{_encode_impl.30} parent=0 // pred_check_branch
    %11 = sbr.rel (0) target = $region5
  $region4: #{_encode_impl.30} parent=0 // pred_region
    _
  $region5: #{_encode_impl.30} parent=0 // pred_fallthru
    _
  // Predicated region
  $region6: #{_encode_impl.30} parent=0 // pred_check
    _
  $region7: #{_encode_impl.30} parent=0 // pred_check_branch
    %13 = sbr.rel (0) target = $region9
  $region8: #{_encode_impl.30} parent=0 // pred_region
    _
  $region9: #{_encode_impl.30} parent=0 // pred_fallthru
    _
  // Predicated region
  $region10: #{_encode_impl.30} parent=0 // pred_check
    _
  $region11: #{_encode_impl.30} parent=0 // pred_check_branch
    %15 = sbr.rel (0) target = $region13
  $region12: #{_encode_impl.30} parent=0 // pred_region
    _
  $region13: #{_encode_impl.30} parent=0 // pred_fallthru
    _
  // Predicated region
  $region14: #{_encode_impl.30} parent=0 // pred_check
    _
  $region15: #{_encode_impl.30} parent=0 // pred_check_branch
    %17 = sbr.rel (0) target = $region17
  $region16: #{_encode_impl.30} parent=0 // pred_region
    _
  $region17: #{_encode_impl.30} parent=0 // pred_fallthru
    _
  // Predicated region
  $region18: #{_encode_impl.30} parent=0 // pred_check
    _
  $region19: #{_encode_impl.30} parent=0 // pred_check_branch
    %19 = sbr.rel (0) target = $region21
  $region20: #{_encode_impl.30} parent=0 // pred_region
    _
  $region21: #{_encode_impl.30} parent=0 // pred_fallthru
    _
  %v21 = vld [vmem:[%s0] sm:$0xf]
  %v22 = vld [vmem:[%s0 + $0x4] sm:$0xf]
  %v23 = vunpack.c.l.bf16 %v21
  %v24 = vunpack.c.l.bf16 %v22
  %vm25 = vcmask 23552
  %v26 = vsel %vm25, %v23, 0.0
  %27 = vadd.xlane.f32.xlu0 %v26
  %v28 = vpop.xlane.xlu0 %27
  %v29 = vsel %vm25, %v24, 0.0
  %30 = vadd.xlane.f32.xlu0 %v29
  %v31 = vpop.xlane.xlu0 %30
  %v32 = vrcp.pop 3.0
  %v33 = vmul.f32 3.0, %v32
  %v34 = vsub.f32 1.0, %v33
  %v35 = vmul.f32 %v32, %v34
  %v36 = vadd.f32 %v32, %v35
  %vm37 = vweird.f32 %v32
  %v38 = vsel %vm37, %v32, %v36
  %v39 = vmul.f32 %v28, %v38
  %v40 = vmul.f32 %v31, %v38
  %v41 = vsub.f32 %v23, %v39
  %v42 = vsub.f32 %v24, %v40
  %v43 = vmul.f32 %v41, %v41
  %v44 = vmul.f32 %v42, %v42
  %v45 = vsel %vm25, %v43, 0.0
  %46 = vadd.xlane.f32.xlu0 %v45
  %v47 = vpop.xlane.xlu0 %46
  %v48 = vsel %vm25, %v44, 0.0
  %49 = vadd.xlane.f32.xlu0 %v48
  %v50 = vpop.xlane.xlu0 %49
  %v51 = vmul.f32 %v47, %v38
  %v52 = vmul.f32 %v50, %v38
  %v53 = vadd.f32 %v51, 1e-06
  %v54 = vadd.f32 %v52, 1e-06
  %v55 = vrsqrt.pop %v53
  %v56 = vmul.f32 %v55, %v53
  %v57 = vmul.f32 %v56, %v55
  %v58 = vmul.f32 0.5, %v57
  %v59 = vsub.f32 1.5, %v58
  %v60 = vmul.f32 %v55, %v59
  %vm61 = vweird.f32 %v53
  %vm62 = vweird.f32 %v55
  %vm63 = vmor %vm61, %vm62
  %v64 = vsel %vm63, %v55, %v60
  %v65 = vrsqrt.pop %v54
  %v66 = vmul.f32 %v65, %v54
  %v67 = vmul.f32 %v66, %v65
  %v68 = vmul.f32 0.5, %v67
  %v69 = vsub.f32 1.5, %v68
  %v70 = vmul.f32 %v65, %v69
  %vm71 = vweird.f32 %v54
  %vm72 = vweird.f32 %v65
  %vm73 = vmor %vm71, %vm72
  %v74 = vsel %vm73, %v65, %v70
  %v75 = vmul.f32 %v41, %v64
  %v76 = vmul.f32 %v42, %v74
  %v77 = vld [vmem:[%s1] sm:$0x1]
  %v79 = vperm.slane %v77, 0
  %v81 = vmul.f32 %v75, %v79
  %v82 = vmul.f32 %v76, %v79
  %v83 = vld [vmem:[%s2] sm:$0x1]
  %v85 = vperm.slane %v83, 0
  %v87 = vadd.f32 %v81, %v85
  %v88 = vadd.f32 %v82, %v85
  %v89 = vpack.c.bf16 %v88, %v87
  %v90 = vld [vmem:[%s3] sm:$0x7]
  %v91 = vpack.c.bf16 %v90, %v90
  %v92 = vld [vmem:[%s4] sm:$0x1]
  %v94 = vperm.slane %v92, 0
  %v97 = vsel %vm25, %v89, 0
  %vm99 = vcmask 1040384
  %vm100 = vcmask 1041408
  %v101 = vsel %vm99, 4294967295, 65535
  %v102 = vsel %vm100, %v101, 0
  %v104 = vand.u32 %v91, %v102
  %106 = vmatpush.bf16.msra.mxu0 0
  %107 = vmatpush.bf16.msra.mxu0 0
  %108 = vmatpush.bf16.msra.mxu0 0
  %109 = vmatpush.bf16.msra.mxu0 0
  %110 = vmatpush.bf16.msra.mxu0 0
  %111 = vmatpush.bf16.msra.mxu0 0
  %112 = vmatpush.bf16.msra.mxu0 0
  %113 = vmatpush.bf16.msra.mxu0 %v104
  %114 = vmatmul.bf16.gmra.mxu0 %v97
  %v115 = vpop.f32.mrf.mxu0
  %v116 = vadd.f32 %v94, %v115
  %v117 = vpop.f32.mrf.mxu0
  %v118 = vadd.f32 %v94, %v117
  %119 = vdwg.mxu0
  %v120 = vmul.f32 %v116, 0.5
  %v121 = vmul.f32 %v118, 0.5
  %v122 = vmul.f32 %v116, 0.044715
  %v123 = vmul.f32 %v118, 0.044715
  %v124 = vmul.f32 %v122, %v116
  %v125 = vmul.f32 %v123, %v118
  %v126 = vmul.f32 %v124, %v116
  %v127 = vmul.f32 %v125, %v118
  %v128 = vadd.f32 %v116, %v126
  %v129 = vadd.f32 %v118, %v127
  %v130 = vmul.f32 %v128, 0.7978846
  %v131 = vmul.f32 %v129, 0.7978846
  %v132 = vtanh.pop %v130
  %v133 = vtanh.pop %v131
  %v134 = vadd.f32 %v132, 1.0
  %v135 = vadd.f32 %v133, 1.0
  %v136 = vmul.f32 %v120, %v134
  %v137 = vmul.f32 %v121, %v135
  %v138 = vpack.c.bf16 %v136, %v136
  %v139 = vpack.c.bf16 %v137, %v137
  %vm140 = vcmask 93184
  %141 = vst.msk [vmem:[%s5] sm:$0xf] %vm140, %v138
  %142 = vst.msk [vmem:[%s5 + $0x4] sm:$0xf] %vm140, %v139
  // Predicated region
  $region22: #{_encode_impl.30} parent=0 // pred_check
    _
  $region23: #{_encode_impl.30} parent=0 // pred_check_branch
    %144 = sbr.rel (0) target = $region25
  $region24: #{_encode_impl.30} parent=0 // pred_region
    _
  $region25: #{_encode_impl.30} parent=0 // pred_fallthru
    _
  // Predicated region
  $region26: #{_encode_impl.30} parent=0 // pred_check
    _
  $region27: #{_encode_impl.30} parent=0 // pred_check_branch
    %146 = sbr.rel (0) target = $region29
  $region28: #{_encode_impl.30} parent=0 // pred_region
    _
  $region29: #{_encode_impl.30} parent=0 // pred_fallthru
    _

// kernel: _encode_impl.23
$region0: #{_encode_impl.23}
  #allocation0 [shape = 'u32[]', space=smem, size = 0x4, offset = 0x4, fixed_abs, tag = 'smem constant byte address 0x4 - core index']
  #allocation1 [shape = 'u32[72,128]{1,0:T(1,128)}', space=vmem, size = 0x9000, scoped, tag = 'internal scratch']
  %s0 = inlined_call_operand.vmem [shape: bf16[16,64], index: 0, kind: input, shape index: {}]
  %s1 = inlined_call_operand.vmem [shape: f32[64,8], index: 1, kind: input, shape index: {}]
  %s2 = inlined_call_operand.vmem [shape: f32[1,8], index: 2, kind: input, shape index: {}]
  %s3 = inlined_call_operand.vmem [shape: bf16[16,8], index: 3, kind: output, shape index: {}]
  %s4 = sld [smem:[#allocation0]]
  $region22: #{_encode_impl.23} parent=0
    _
  %s6 = ssub.s32 1, %s4
  %s7 = scalar_select 0, %s6, %s4
  // Predicated region
  $region2: #{_encode_impl.23} parent=0 // pred_check
    _
  $region3: #{_encode_impl.23} parent=0 // pred_check_branch
    %9 = sbr.rel (0) target = $region5
  $region4: #{_encode_impl.23} parent=0 // pred_region
    _
  $region5: #{_encode_impl.23} parent=0 // pred_fallthru
    _
  // Predicated region
  $region6: #{_encode_impl.23} parent=0 // pred_check
    _
  $region7: #{_encode_impl.23} parent=0 // pred_check_branch
    %11 = sbr.rel (0) target = $region9
  $region8: #{_encode_impl.23} parent=0 // pred_region
    _
  $region9: #{_encode_impl.23} parent=0 // pred_fallthru
    _
  // Predicated region
  $region10: #{_encode_impl.23} parent=0 // pred_check
    _
  $region11: #{_encode_impl.23} parent=0 // pred_check_branch
    %13 = sbr.rel (0) target = $region13
  $region12: #{_encode_impl.23} parent=0 // pred_region
    _
  $region13: #{_encode_impl.23} parent=0 // pred_fallthru
    _
  %v15 = vld [vmem:[%s0] sm:$0xf]
  %v16 = vld [vmem:[%s0 + $0x4] sm:$0xf]
  %v17 = vld [vmem:[%s1] sm:$0xff]
  %v18 = vld [vmem:[%s1 + $0x8] sm:$0xff]
  %v19 = vld [vmem:[%s1 + $0x10] sm:$0xff]
  %v20 = vld [vmem:[%s1 + $0x18] sm:$0xff]
  %v21 = vld [vmem:[%s1 + $0x20] sm:$0xff]
  %v22 = vld [vmem:[%s1 + $0x28] sm:$0xff]
  %v23 = vld [vmem:[%s1 + $0x30] sm:$0xff]
  %v24 = vld [vmem:[%s1 + $0x38] sm:$0xff]
  %v25 = vpack.c.bf16 %v18, %v17
  %v26 = vpack.c.bf16 %v20, %v19
  %v27 = vpack.c.bf16 %v22, %v21
  %v28 = vpack.c.bf16 %v24, %v23
  %v29 = vld [vmem:[%s2] sm:$0x1]
  %v31 = vperm.slane %v29, 0
  %v35 = vunpack.c.l.b16 %v15
  %v36 = vunpack.c.l.b16 %v16
  %v37 = vpack.c.b16 %v36, %v35
  %vm38 = vcmask 523264
  %v40 = vsel %vm38, %v37, 0
  %42 = vmatpush.bf16.msra.mxu0 0
  %43 = vmatpush.bf16.msra.mxu0 0
  %44 = vmatpush.bf16.msra.mxu0 0
  %45 = vmatpush.bf16.msra.mxu0 0
  %46 = vmatpush.bf16.msra.mxu0 %v28
  %47 = vmatpush.bf16.msra.mxu0 %v27
  %48 = vmatpush.bf16.msra.mxu0 %v26
  %49 = vmatpush.bf16.msra.mxu0 %v25
  %50 = vmatmul.bf16.gmra.mxu0 %v40
  %v51 = vpop.f32.mrf.mxu0
  %v52 = vadd.f32 %v31, %v51
  %v53 = vpop.f32.mrf.mxu0
  %v54 = vadd.f32 %v31, %v53
  %55 = vdwg.mxu0
  %v56 = vpack.c.bf16 %v52, %v52
  %v57 = vpack.c.bf16 %v54, %v54
  %vm58 = vcmask 60416
  %59 = vst.msk [vmem:[%s3] sm:$0xf] %vm58, %v56
  %60 = vst.msk [vmem:[%s3 + $0x4] sm:$0xf] %vm58, %v57
  // Predicated region
  $region14: #{_encode_impl.23} parent=0 // pred_check
    _
  $region15: #{_encode_impl.23} parent=0 // pred_check_branch
    %62 = sbr.rel (0) target = $region17
  $region16: #{_encode_impl.23} parent=0 // pred_region
    _
  $region17: #{_encode_impl.23} parent=0 // pred_fallthru
    _
  // Predicated region
  $region18: #{_encode_impl.23} parent=0 // pred_check
    _
  $region19: #{_encode_impl.23} parent=0 // pred_check_branch
    %64 = sbr.rel (0) target = $region21
  $region20: #{_encode_impl.23} parent=0 // pred_region
    _
  $region21: #{_encode_impl.23} parent=0 // pred_fallthru
    _

// kernel: _encode_impl.24
$region0: #{_encode_impl.24}
  #allocation0 [shape = 'u32[]', space=smem, size = 0x4, offset = 0x4, fixed_abs, tag = 'smem constant byte address 0x4 - core index']
  #allocation1 [shape = 'u32[72,128]{1,0:T(1,128)}', space=vmem, size = 0x9000, scoped, tag = 'internal scratch']
  %s0 = inlined_call_operand.vmem [shape: bf16[16,8], index: 0, kind: input, shape index: {}]
  %s1 = inlined_call_operand.vmem [shape: f32[1,8], index: 1, kind: input, shape index: {}]
  %s2 = inlined_call_operand.vmem [shape: f32[1,8], index: 2, kind: input, shape index: {}]
  %s3 = inlined_call_operand.vmem [shape: f32[8,32], index: 3, kind: input, shape index: {}]
  %s4 = inlined_call_operand.vmem [shape: f32[1,32], index: 4, kind: input, shape index: {}]
  %s5 = inlined_call_operand.vmem [shape: bf16[16,32], index: 5, kind: output, shape index: {}]
  %s6 = sld [smem:[#allocation0]]
  $region30: #{_encode_impl.24} parent=0
    _
  %s8 = ssub.s32 1, %s6
  %s9 = scalar_select 0, %s8, %s6
  // Predicated region
  $region2: #{_encode_impl.24} parent=0 // pred_check
    _
  $region3: #{_encode_impl.24} parent=0 // pred_check_branch
    %11 = sbr.rel (0) target = $region5
  $region4: #{_encode_impl.24} parent=0 // pred_region
    _
  $region5: #{_encode_impl.24} parent=0 // pred_fallthru
    _
  // Predicated region
  $region6: #{_encode_impl.24} parent=0 // pred_check
    _
  $region7: #{_encode_impl.24} parent=0 // pred_check_branch
    %13 = sbr.rel (0) target = $region9
  $region8: #{_encode_impl.24} parent=0 // pred_region
    _
  $region9: #{_encode_impl.24} parent=0 // pred_fallthru
    _
  // Predicated region
  $region10: #{_encode_impl.24} parent=0 // pred_check
    _
  $region11: #{_encode_impl.24} parent=0 // pred_check_branch
    %15 = sbr.rel (0) target = $region13
  $region12: #{_encode_impl.24} parent=0 // pred_region
    _
  $region13: #{_encode_impl.24} parent=0 // pred_fallthru
    _
  // Predicated region
  $region14: #{_encode_impl.24} parent=0 // pred_check
    _
  $region15: #{_encode_impl.24} parent=0 // pred_check_branch
    %17 = sbr.rel (0) target = $region17
  $region16: #{_encode_impl.24} parent=0 // pred_region
    _
  $region17: #{_encode_impl.24} parent=0 // pred_fallthru
    _
  // Predicated region
  $region18: #{_encode_impl.24} parent=0 // pred_check
    _
  $region19: #{_encode_impl.24} parent=0 // pred_check_branch
    %19 = sbr.rel (0) target = $region21
  $region20: #{_encode_impl.24} parent=0 // pred_region
    _
  $region21: #{_encode_impl.24} parent=0 // pred_fallthru
    _
  %v21 = vld [vmem:[%s0] sm:$0xf]
  %v22 = vld [vmem:[%s0 + $0x4] sm:$0xf]
  %v23 = vunpack.c.l.bf16 %v21
  %v24 = vunpack.c.l.bf16 %v22
  %vm25 = vcmask 64512
  %v26 = vsel %vm25, %v23, 0.0
  %27 = vadd.xlane.f32.xlu0 %v26
  %v28 = vpop.xlane.xlu0 %27
  %v29 = vsel %vm25, %v24, 0.0
  %30 = vadd.xlane.f32.xlu0 %v29
  %v31 = vpop.xlane.xlu0 %30
  %v32 = vrcp.pop 8.0
  %v33 = vmul.f32 8.0, %v32
  %v34 = vsub.f32 1.0, %v33
  %v35 = vmul.f32 %v32, %v34
  %v36 = vadd.f32 %v32, %v35
  %vm37 = vweird.f32 %v32
  %v38 = vsel %vm37, %v32, %v36
  %v39 = vmul.f32 %v28, %v38
  %v40 = vmul.f32 %v31, %v38
  %v41 = vsub.f32 %v23, %v39
  %v42 = vsub.f32 %v24, %v40
  %v43 = vmul.f32 %v41, %v41
  %v44 = vmul.f32 %v42, %v42
  %v45 = vsel %vm25, %v43, 0.0
  %46 = vadd.xlane.f32.xlu0 %v45
  %v47 = vpop.xlane.xlu0 %46
  %v48 = vsel %vm25, %v44, 0.0
  %49 = vadd.xlane.f32.xlu0 %v48
  %v50 = vpop.xlane.xlu0 %49
  %v51 = vmul.f32 %v47, %v38
  %v52 = vmul.f32 %v50, %v38
  %v53 = vadd.f32 %v51, 1e-06
  %v54 = vadd.f32 %v52, 1e-06
  %v55 = vrsqrt.pop %v53
  %v56 = vmul.f32 %v55, %v53
  %v57 = vmul.f32 %v56, %v55
  %v58 = vmul.f32 0.5, %v57
  %v59 = vsub.f32 1.5, %v58
  %v60 = vmul.f32 %v55, %v59
  %vm61 = vweird.f32 %v53
  %vm62 = vweird.f32 %v55
  %vm63 = vmor %vm61, %vm62
  %v64 = vsel %vm63, %v55, %v60
  %v65 = vrsqrt.pop %v54
  %v66 = vmul.f32 %v65, %v54
  %v67 = vmul.f32 %v66, %v65
  %v68 = vmul.f32 0.5, %v67
  %v69 = vsub.f32 1.5, %v68
  %v70 = vmul.f32 %v65, %v69
  %vm71 = vweird.f32 %v54
  %vm72 = vweird.f32 %v65
  %vm73 = vmor %vm71, %vm72
  %v74 = vsel %vm73, %v65, %v70
  %v75 = vmul.f32 %v41, %v64
  %v76 = vmul.f32 %v42, %v74
  %v77 = vld [vmem:[%s1] sm:$0x1]
  %v79 = vperm.slane %v77, 0
  %v81 = vmul.f32 %v75, %v79
  %v82 = vmul.f32 %v76, %v79
  %v83 = vld [vmem:[%s2] sm:$0x1]
  %v85 = vperm.slane %v83, 0
  %v87 = vadd.f32 %v81, %v85
  %v88 = vadd.f32 %v82, %v85
  %v89 = vpack.c.bf16 %v88, %v87
  %v90 = vld [vmem:[%s3] sm:$0xff]
  %v91 = vpack.c.bf16 %v90, %v90
  %v92 = vld [vmem:[%s4] sm:$0x1]
  %v94 = vperm.slane %v92, 0
  %v97 = vsel %vm25, %v89, 0
  %vm99 = vcmask 1043456
  %v101 = vsel %vm99, %v91, 0
  %103 = vmatpush.bf16.msra.mxu0 0
  %104 = vmatpush.bf16.msra.mxu0 0
  %105 = vmatpush.bf16.msra.mxu0 0
  %106 = vmatpush.bf16.msra.mxu0 0
  %107 = vmatpush.bf16.msra.mxu0 0
  %108 = vmatpush.bf16.msra.mxu0 0
  %109 = vmatpush.bf16.msra.mxu0 0
  %110 = vmatpush.bf16.msra.mxu0 %v101
  %111 = vmatmul.bf16.gmra.mxu0 %v97
  %v112 = vpop.f32.mrf.mxu0
  %v113 = vadd.f32 %v94, %v112
  %v114 = vpop.f32.mrf.mxu0
  %v115 = vadd.f32 %v94, %v114
  %116 = vdwg.mxu0
  %v117 = vmul.f32 %v113, 0.5
  %v118 = vmul.f32 %v115, 0.5
  %v119 = vmul.f32 %v113, 0.044715
  %v120 = vmul.f32 %v115, 0.044715
  %v121 = vmul.f32 %v119, %v113
  %v122 = vmul.f32 %v120, %v115
  %v123 = vmul.f32 %v121, %v113
  %v124 = vmul.f32 %v122, %v115
  %v125 = vadd.f32 %v113, %v123
  %v126 = vadd.f32 %v115, %v124
  %v127 = vmul.f32 %v125, 0.7978846
  %v128 = vmul.f32 %v126, 0.7978846
  %v129 = vtanh.pop %v127
  %v130 = vtanh.pop %v128
  %v131 = vadd.f32 %v129, 1.0
  %v132 = vadd.f32 %v130, 1.0
  %v133 = vmul.f32 %v117, %v131
  %v134 = vmul.f32 %v118, %v132
  %v135 = vpack.c.bf16 %v133, %v133
  %v136 = vpack.c.bf16 %v134, %v134
  %vm137 = vcmask 257024
  %138 = vst.msk [vmem:[%s5] sm:$0xf] %vm137, %v135
  %139 = vst.msk [vmem:[%s5 + $0x4] sm:$0xf] %vm137, %v136
  // Predicated region
  $region22: #{_encode_impl.24} parent=0 // pred_check
    _
  $region23: #{_encode_impl.24} parent=0 // pred_check_branch
    %141 = sbr.rel (0) target = $region25
  $region24: #{_encode_impl.24} parent=0 // pred_region
    _
  $region25: #{_encode_impl.24} parent=0 // pred_fallthru
    _
  // Predicated region
  $region26: #{_encode_impl.24} parent=0 // pred_check
    _
  $region27: #{_encode_impl.24} parent=0 // pred_check_branch
    %143 = sbr.rel (0) target = $region29
  $region28: #{_encode_impl.24} parent=0 // pred_region
    _
  $region29: #{_encode_impl.24} parent=0 // pred_fallthru
    _

// kernel: _encode_impl.25
$region0: #{_encode_impl.25}
  #allocation0 [shape = 'u32[]', space=smem, size = 0x4, offset = 0x4, fixed_abs, tag = 'smem constant byte address 0x4 - core index']
  #allocation1 [shape = 'u32[72,128]{1,0:T(1,128)}', space=vmem, size = 0x9000, scoped, tag = 'internal scratch']
  %s0 = inlined_call_operand.vmem [shape: bf16[16,32], index: 0, kind: input, shape index: {}]
  %s1 = inlined_call_operand.vmem [shape: f32[32,8], index: 1, kind: input, shape index: {}]
  %s2 = inlined_call_operand.vmem [shape: f32[1,8], index: 2, kind: input, shape index: {}]
  %s3 = inlined_call_operand.vmem [shape: bf16[16,8], index: 3, kind: output, shape index: {}]
  %s4 = sld [smem:[#allocation0]]
  $region22: #{_encode_impl.25} parent=0
    _
  %s6 = ssub.s32 1, %s4
  %s7 = scalar_select 0, %s6, %s4
  // Predicated region
  $region2: #{_encode_impl.25} parent=0 // pred_check
    _
  $region3: #{_encode_impl.25} parent=0 // pred_check_branch
    %9 = sbr.rel (0) target = $region5
  $region4: #{_encode_impl.25} parent=0 // pred_region
    _
  $region5: #{_encode_impl.25} parent=0 // pred_fallthru
    _
  // Predicated region
  $region6: #{_encode_impl.25} parent=0 // pred_check
    _
  $region7: #{_encode_impl.25} parent=0 // pred_check_branch
    %11 = sbr.rel (0) target = $region9
  $region8: #{_encode_impl.25} parent=0 // pred_region
    _
  $region9: #{_encode_impl.25} parent=0 // pred_fallthru
    _
  // Predicated region
  $region10: #{_encode_impl.25} parent=0 // pred_check
    _
  $region11: #{_encode_impl.25} parent=0 // pred_check_branch
    %13 = sbr.rel (0) target = $region13
  $region12: #{_encode_impl.25} parent=0 // pred_region
    _
  $region13: #{_encode_impl.25} parent=0 // pred_fallthru
    _
  %v15 = vld [vmem:[%s0] sm:$0xf]
  %v16 = vld [vmem:[%s0 + $0x4] sm:$0xf]
  %v17 = vld [vmem:[%s1] sm:$0xff]
  %v18 = vld [vmem:[%s1 + $0x8] sm:$0xff]
  %v19 = vld [vmem:[%s1 + $0x10] sm:$0xff]
  %v20 = vld [vmem:[%s1 + $0x18] sm:$0xff]
  %v21 = vpack.c.bf16 %v18, %v17
  %v22 = vpack.c.bf16 %v20, %v19
  %v23 = vld [vmem:[%s2] sm:$0x1]
  %v25 = vperm.slane %v23, 0
  %v29 = vunpack.c.l.b16 %v15
  %v30 = vunpack.c.l.b16 %v16
  %v31 = vpack.c.b16 %v30, %v29
  %vm32 = vcmask 261120
  %v34 = vsel %vm32, %v31, 0
  %36 = vmatpush.bf16.msra.mxu0 0
  %37 = vmatpush.bf16.msra.mxu0 0
  %38 = vmatpush.bf16.msra.mxu0 0
  %39 = vmatpush.bf16.msra.mxu0 0
  %40 = vmatpush.bf16.msra.mxu0 0
  %41 = vmatpush.bf16.msra.mxu0 0
  %42 = vmatpush.bf16.msra.mxu0 %v22
  %43 = vmatpush.bf16.msra.mxu0 %v21
  %44 = vmatmul.bf16.gmra.mxu0 %v34
  %v45 = vpop.f32.mrf.mxu0
  %v46 = vadd.f32 %v25, %v45
  %v47 = vpop.f32.mrf.mxu0
  %v48 = vadd.f32 %v25, %v47
  %49 = vdwg.mxu0
  %v50 = vpack.c.bf16 %v46, %v46
  %v51 = vpack.c.bf16 %v48, %v48
  %vm52 = vcmask 60416
  %53 = vst.msk [vmem:[%s3] sm:$0xf] %vm52, %v50
  %54 = vst.msk [vmem:[%s3 + $0x4] sm:$0xf] %vm52, %v51
  // Predicated region
  $region14: #{_encode_impl.25} parent=0 // pred_check
    _
  $region15: #{_encode_impl.25} parent=0 // pred_check_branch
    %56 = sbr.rel (0) target = $region17
  $region16: #{_encode_impl.25} parent=0 // pred_region
    _
  $region17: #{_encode_impl.25} parent=0 // pred_fallthru
    _
  // Predicated region
  $region18: #{_encode_impl.25} parent=0 // pred_check
    _
  $region19: #{_encode_impl.25} parent=0 // pred_check_branch
    %58 = sbr.rel (0) target = $region21
  $region20: #{_encode_impl.25} parent=0 // pred_region
    _
  $region21: #{_encode_impl.25} parent=0 // pred_fallthru
    _

</llo_original>
